<compile_context>
chip_gen: v5e
topology: v5e:2x2
jax: 0.10.0
libtpu: 0.0.40
codegen_flags: <defaults>
</compile_context>

<pallas_src>
import functools
import math

import jax
import jax.numpy as jnp
from jax import lax
from jax.experimental import pallas as pl
from jax.experimental.pallas import tpu as pltpu


# ----------------------------- Pallas kernels ------------------------------ #

def _spatial_conv_stats_kernel(xcol_ref, w_ref, b_ref, y_ref, psum_ref, psq_ref):
    """Spatial conv as patch-matmul + per-block partial BN statistics.

    Outputs per grid block:
      y_ref    : (row_tile, M) conv output
      psum_ref : (1, 1, M)     partial sum of y over this block's rows
      psq_ref  : (1, 1, M)     partial sum of y*y over this block's rows
    No cross-step accumulator -> grid axis is safely "parallel".
    """
    y = jnp.dot(xcol_ref[...], w_ref[...], preferred_element_type=jnp.float32)
    y = y + b_ref[...]
    y_ref[...] = y.astype(y_ref.dtype)
    psum_ref[0] = jnp.sum(y, axis=0, keepdims=True)
    psq_ref[0] = jnp.sum(y * y, axis=0, keepdims=True)


def _bn_relu_tconv_kernel(y_ref, scale_ref, shift_ref, w2_ref, b2_ref, o_ref,
                          *, T, To, kt, st, pt, mxu_dtype):
    """Fused BN-affine + ReLU + temporal conv.

    Blocks:
      y_ref  : (1, T,  HWt, M)   spatial-conv output (full time extent)
      o_ref  : (1, To, HWt, Cout)
      w2_ref : (kt, M, Cout), b2_ref: (1, Cout), scale/shift: (1, M)
    The kt temporal taps (incl. zero time-padding) are resolved at trace time,
    so z / the temporal im2col never exist in HBM.
    """
    scale = scale_ref[...]                     # (1, M)
    shift = shift_ref[...]                     # (1, M)
    b2 = b2_ref[...]                           # (1, Cout)
    hw = y_ref.shape[2]
    cout = b2.shape[1]
    for to in range(To):
        acc = None
        for dt in range(kt):
            t_src = to * st - pt + dt
            if 0 <= t_src < T:                 # static: taps in the zero pad skipped
                z = jnp.maximum(y_ref[0, t_src] * scale + shift, 0.0)
                c = jnp.dot(z.astype(mxu_dtype), w2_ref[dt],
                            preferred_element_type=jnp.float32)
                acc = c if acc is None else acc + c
        if acc is None:
            acc = jnp.zeros((hw, cout), jnp.float32)
        o_ref[0, to] = (acc + b2).astype(o_ref.dtype)


# ------------------------------ helpers ------------------------------------- #

def _pick_tile(total, bytes_per_row, *, target=1024, budget=8 * 2 ** 20):
    """Largest divisor of `total` that is a multiple of 8, <= target, and whose
    (double-buffered) slab fits `budget` bytes. Falls back to the full extent
    (which is always layout-legal)."""
    cap = min(target, max(8, budget // max(int(bytes_per_row), 1)))
    best = None
    d = 8
    hi = min(cap, total)
    while d <= hi:
        if total % d == 0:
            best = d
        d += 8
    return best if best is not None else total


# ------------------------------ wrapper ------------------------------------- #

def r2plus1d_block(x, params, kernel, stride, padding, *, eps=1e-5,
                   compute_dtype=jnp.float32):
    kt, kh, kw = kernel
    st, sh, sw = stride
    pt, ph, pw = padding

    w1, b1 = params["w1"], params["b1"]       # (M, Cin, 1, kh, kw), (M,)
    gamma, beta = params["gamma"], params["beta"]
    w2, b2 = params["w2"], params["b2"]       # (Cout, M, kt, 1, 1), (Cout,)

    N, Cin, T, H, W = x.shape
    M = w1.shape[0]
    Cout = w2.shape[0]
    Ho = (H + 2 * ph - kh) // sh + 1
    Wo = (W + 2 * pw - kw) // sw + 1
    To = (T + 2 * pt - kt) // st + 1
    HW = Ho * Wo
    K1 = Cin * kh * kw
    P = N * T * HW
    esize = jnp.dtype(compute_dtype).itemsize

    # ---- spatial im2col (plain-JAX glue): rows=(n,t,ho,wo), cols=(c,kh,kw) ----
    # TODO(synk): for production sizes fold the kh*kw taps into a reduction grid
    # axis over strided slices of the padded input instead of materializing the
    # kh*kw-times-larger im2col slab in HBM (use compute_dtype=bf16 meanwhile).
    xp = jnp.pad(x, ((0, 0), (0, 0), (0, 0), (ph, ph), (pw, pw)))
    taps = []
    for dh in range(kh):
        for dw in range(kw):
            taps.append(xp[:, :, :,
                           dh:dh + (Ho - 1) * sh + 1:sh,
                           dw:dw + (Wo - 1) * sw + 1:sw])
    xcol = jnp.stack(taps, axis=2).reshape(N, K1, T, Ho, Wo)
    xcol = jnp.transpose(xcol, (0, 2, 3, 4, 1)).reshape(P, K1)
    xcol = xcol.astype(compute_dtype)

    w1m = w1.reshape(M, K1).T.astype(compute_dtype)       # (K1, M)
    b1m = b1.reshape(1, M).astype(jnp.float32)

    # ---- pass 1: spatial conv + per-block partial BN sums ----
    row_tile = _pick_tile(P, 2 * (K1 * esize + M * 4))
    assert P % row_tile == 0
    nb1 = P // row_tile

    cost1 = pl.CostEstimate(
        flops=int(2 * P * K1 * M), transcendentals=0,
        bytes_accessed=int(P * K1 * esize + K1 * M * esize
                           + (P * M + 2 * nb1 * M + 2 * M) * 4))

    y, psum, psq = pl.pallas_call(
        _spatial_conv_stats_kernel,
        out_shape=(jax.ShapeDtypeStruct((P, M), jnp.float32),
                   jax.ShapeDtypeStruct((nb1, 1, M), jnp.float32),
                   jax.ShapeDtypeStruct((nb1, 1, M), jnp.float32)),
        grid_spec=pltpu.PrefetchScalarGridSpec(
            num_scalar_prefetch=0, grid=(nb1,),
            in_specs=[pl.BlockSpec((row_tile, K1), lambda i: (i, 0)),
                      pl.BlockSpec((K1, M), lambda i: (0, 0)),
                      pl.BlockSpec((1, M), lambda i: (0, 0))],
            out_specs=[pl.BlockSpec((row_tile, M), lambda i: (i, 0)),
                       pl.BlockSpec((1, 1, M), lambda i: (i, 0, 0)),
                       pl.BlockSpec((1, 1, M), lambda i: (i, 0, 0))]),
        compiler_params=pltpu.CompilerParams(
            dimension_semantics=("parallel",),
            vmem_limit_bytes=32 * 1024 * 1024),
        cost_estimate=cost1,
    )(xcol, w1m, b1m)

    # ---- BN batch statistics (training-mode semantics, biased variance) ----
    # NOTE: E[y^2]-E[y]^2 in f32 is fine at these scales; use a shifted/Welford
    # formulation for very large P / large activation magnitudes.
    count = jnp.float32(P)
    mean = jnp.sum(psum, axis=(0, 1)) / count              # (M,)
    var = jnp.sum(psq, axis=(0, 1)) / count - mean * mean  # (M,)
    inv = lax.rsqrt(var + eps)
    scale = (gamma * inv).reshape(1, M).astype(jnp.float32)
    shift = (beta - mean * gamma * inv).reshape(1, M).astype(jnp.float32)

    # ---- pass 2: fused BN + ReLU + temporal conv (no z / zcol in HBM) ----
    y4 = y.reshape(N, T, HW, M)                             # free reshape
    w2k = jnp.transpose(w2.reshape(Cout, M, kt), (2, 1, 0)).astype(compute_dtype)
    b2m = b2.reshape(1, Cout).astype(jnp.float32)

    hw_tile = _pick_tile(HW, 2 * (T * M + To * Cout) * 4)
    assert HW % hw_tile == 0
    nb2 = HW // hw_tile
    P2 = N * To * HW

    kernel2 = functools.partial(_bn_relu_tconv_kernel,
                                T=T, To=To, kt=kt, st=st, pt=pt,
                                mxu_dtype=compute_dtype)

    cost2 = pl.CostEstimate(
        flops=int(2 * P2 * kt * M * Cout), transcendentals=0,
        bytes_accessed=int((N * T * HW * M + P2 * Cout + 2 * M + Cout) * 4
                           + kt * M * Cout * esize))

    out4 = pl.pallas_call(
        kernel2,
        out_shape=jax.ShapeDtypeStruct((N, To, HW, Cout), jnp.float32),
        grid_spec=pltpu.PrefetchScalarGridSpec(
            num_scalar_prefetch=0, grid=(N, nb2),
            in_specs=[pl.BlockSpec((1, T, hw_tile, M), lambda n, s: (n, 0, s, 0)),
                      pl.BlockSpec((1, M), lambda n, s: (0, 0)),
                      pl.BlockSpec((1, M), lambda n, s: (0, 0)),
                      pl.BlockSpec((kt, M, Cout), lambda n, s: (0, 0, 0)),
                      pl.BlockSpec((1, Cout), lambda n, s: (0, 0))],
            out_specs=pl.BlockSpec((1, To, hw_tile, Cout),
                                   lambda n, s: (n, 0, s, 0))),
        compiler_params=pltpu.CompilerParams(
            dimension_semantics=("parallel", "parallel"),
            vmem_limit_bytes=32 * 1024 * 1024),
        cost_estimate=cost2,
    )(y4, scale, shift, w2k, b2m)

    # (N, To, Ho*Wo, Cout) -> NCDHW
    return out4.reshape(N, To, Ho, Wo, Cout).transpose(0, 4, 1, 2, 3)


# --------------------------- pure-JAX reference ----------------------------- #

def reference(x, params, kernel, stride, padding, eps=1e-5):
    kt, kh, kw = kernel
    st, sh, sw = stride
    pt, ph, pw = padding
    dn = lax.conv_dimension_numbers(x.shape, params["w1"].shape,
                                    ("NCDHW", "OIDHW", "NCDHW"))
    y = lax.conv_general_dilated(x, params["w1"], (1, sh, sw),
                                 [(0, 0), (ph, ph), (pw, pw)],
                                 dimension_numbers=dn)
    y = y + params["b1"].reshape(1, -1, 1, 1, 1)
    mean = jnp.mean(y, axis=(0, 2, 3, 4), keepdims=True)
    var = jnp.mean((y - mean) ** 2, axis=(0, 2, 3, 4), keepdims=True)
    yn = (y - mean) * lax.rsqrt(var + eps)
    yn = yn * params["gamma"].reshape(1, -1, 1, 1, 1) + params["beta"].reshape(1, -1, 1, 1, 1)
    z = jnp.maximum(yn, 0.0)
    dn2 = lax.conv_dimension_numbers(z.shape, params["w2"].shape,
                                     ("NCDHW", "OIDHW", "NCDHW"))
    o = lax.conv_general_dilated(z, params["w2"], (st, 1, 1),
                                 [(pt, pt), (0, 0), (0, 0)],
                                 dimension_numbers=dn2)
    return o + params["b2"].reshape(1, -1, 1, 1, 1)


# --------------------------------- main ------------------------------------- #

if __name__ == "__main__":
    in_channels, out_channels = 4, 8
    kernel, stride, padding = (3, 3, 3), (1, 1, 1), (1, 1, 1)
    kt, kh, kw = kernel
    M = int(math.floor(kt * kh * kw * in_channels * out_channels /
                       (kh * kw * in_channels + kt * out_channels)))  # interim = 14
    N, T, H, W = 2, 4, 8, 8

    key = jax.random.PRNGKey(0)
    ks = jax.random.split(key, 7)
    params = {
        "w1": 0.1 * jax.random.normal(ks[0], (M, in_channels, 1, kh, kw), jnp.float32),
        "b1": 0.1 * jax.random.normal(ks[1], (M,), jnp.float32),
        "gamma": 1.0 + 0.1 * jax.random.normal(ks[2], (M,), jnp.float32),
        "beta": 0.1 * jax.random.normal(ks[3], (M,), jnp.float32),
        "w2": 0.1 * jax.random.normal(ks[4], (out_channels, M, kt, 1, 1), jnp.float32),
        "b2": 0.1 * jax.random.normal(ks[5], (out_channels,), jnp.float32),
    }
    x = jax.random.normal(ks[6], (N, in_channels, T, H, W), jnp.float32)

    # f32 by default (keeps the 1e-3 tolerance); pass compute_dtype=jnp.bfloat16
    # on v6e/v7x to halve HBM traffic of the matmul slabs.
    fwd = jax.jit(functools.partial(r2plus1d_block, kernel=kernel,
                                    stride=stride, padding=padding))
    out = jax.block_until_ready(fwd(x, params))
    ref = reference(x, params, kernel, stride, padding)
    assert out.shape == ref.shape, (out.shape, ref.shape)
    err = float(jnp.max(jnp.abs(out - ref)))
    assert err < 1e-3, f"max abs error too large: {err}"
    print("KERNEL_OK")
</pallas_src>

<mosaic_0001>
module attributes {stable_mosaic.version = 11 : i64} {
  func.func @_spatial_conv_stats_kernel(%arg0: i32, %arg1: memref<512x36xf32, #tpu.memory_space<vmem>>, %arg2: memref<36x14xf32, #tpu.memory_space<vmem>>, %arg3: memref<1x14xf32, #tpu.memory_space<vmem>>, %arg4: memref<512x14xf32, #tpu.memory_space<vmem>>, %arg5: memref<1x1x14xf32, #tpu.memory_space<vmem>>, %arg6: memref<1x1x14xf32, #tpu.memory_space<vmem>>) attributes {dimension_semantics = [#tpu.dimension_semantics<parallel>], iteration_bounds = array<i64: 1>, scalar_prefetch = 0 : i64, scratch_operands = 0 : i64, tpu.core_type = #tpu.core_type<tc>, window_params = [{transform_indices = @transform_0, window_bounds = array<i64: 512, 36>}, {pipeline_mode = #tpu.pipeline_mode<synchronous>, transform_indices = @transform_1, window_bounds = array<i64: 36, 14>}, {pipeline_mode = #tpu.pipeline_mode<synchronous>, transform_indices = @transform_2, window_bounds = array<i64: 1, 14>}, {transform_indices = @transform_3, window_bounds = array<i64: 512, 14>}, {transform_indices = @transform_4, window_bounds = array<i64: 1, 1, 14>}, {transform_indices = @transform_5, window_bounds = array<i64: 1, 1, 14>}]} {
    %c0 = arith.constant 0 : index
    %c0_0 = arith.constant 0 : index
    %0 = vector.load %arg1[%c0, %c0_0] : memref<512x36xf32, #tpu.memory_space<vmem>>, vector<512x36xf32>
    %c0_1 = arith.constant 0 : index
    %c0_2 = arith.constant 0 : index
    %1 = vector.load %arg2[%c0_1, %c0_2] : memref<36x14xf32, #tpu.memory_space<vmem>>, vector<36x14xf32>
    %cst = arith.constant dense<0.000000e+00> : vector<512x14xf32>
    %2 = tpu.matmul %0, %1, %cst {dimension_numbers = #tpu.dot_dimension_numbers<[1], [0], [0], [1], [0, 0, 1, 1], [], []>} : vector<512x36xf32>, vector<36x14xf32>, vector<512x14xf32> -> vector<512x14xf32>
    %c0_3 = arith.constant 0 : index
    %c0_4 = arith.constant 0 : index
    %3 = vector.load %arg3[%c0_3, %c0_4] : memref<1x14xf32, #tpu.memory_space<vmem>>, vector<1x14xf32>
    %4 = vector.broadcast %3 : vector<1x14xf32> to vector<512x14xf32>
    %5 = arith.addf %2, %4 : vector<512x14xf32>
    %c0_5 = arith.constant 0 : index
    %c0_6 = arith.constant 0 : index
    %6 = vector.load %arg4[%c0_5, %c0_6] : memref<512x14xf32, #tpu.memory_space<vmem>>, vector<512x14xf32>
    tpu.vector_store %arg4[%c0_5, %c0_6], %5 {strides = array<i32>} : memref<512x14xf32, #tpu.memory_space<vmem>>, vector<512x14xf32>,
    %cst_7 = arith.constant dense<0.000000e+00> : vector<14xf32>
    %7 = vector.multi_reduction <add>, %5, %cst_7 [0] : vector<512x14xf32> to vector<14xf32>
    %8 = vector.shape_cast %7 : vector<14xf32> to vector<1x14xf32>
    %c0_8 = arith.constant 0 : index
    %c0_9 = arith.constant 0 : index
    %c0_10 = arith.constant 0 : index
    %9 = vector.load %arg5[%c0_8, %c0_9, %c0_10] : memref<1x1x14xf32, #tpu.memory_space<vmem>>, vector<1x1x14xf32>
    %10 = vector.shape_cast %9 : vector<1x1x14xf32> to vector<1x14xf32>
    %11 = vector.shape_cast %8 : vector<1x14xf32> to vector<1x1x14xf32>
    tpu.vector_store %arg5[%c0_8, %c0_9, %c0_10], %11 {strides = array<i32>} : memref<1x1x14xf32, #tpu.memory_space<vmem>>, vector<1x1x14xf32>,
    %12 = arith.mulf %5, %5 : vector<512x14xf32>
    %cst_11 = arith.constant dense<0.000000e+00> : vector<14xf32>
    %13 = vector.multi_reduction <add>, %12, %cst_11 [0] : vector<512x14xf32> to vector<14xf32>
    %14 = vector.shape_cast %13 : vector<14xf32> to vector<1x14xf32>
    %c0_12 = arith.constant 0 : index
    %c0_13 = arith.constant 0 : index
    %c0_14 = arith.constant 0 : index
    %15 = vector.load %arg6[%c0_12, %c0_13, %c0_14] : memref<1x1x14xf32, #tpu.memory_space<vmem>>, vector<1x1x14xf32>
    %16 = vector.shape_cast %15 : vector<1x1x14xf32> to vector<1x14xf32>
    %17 = vector.shape_cast %14 : vector<1x14xf32> to vector<1x1x14xf32>
    tpu.vector_store %arg6[%c0_12, %c0_13, %c0_14], %17 {strides = array<i32>} : memref<1x1x14xf32, #tpu.memory_space<vmem>>, vector<1x1x14xf32>,
    return
  }
  func.func @transform_0(%arg0: i32) -> (i32, i32) {
    %c0_i32 = arith.constant 0 : i32
    %c0_i32_0 = arith.constant 0 : i32
    return %arg0, %c0_i32 : i32, i32
  }
  func.func @transform_1(%arg0: i32) -> (i32, i32) {
    %c0_i32 = arith.constant 0 : i32
    %c0_i32_0 = arith.constant 0 : i32
    %c0_i32_1 = arith.constant 0 : i32
    return %c0_i32, %c0_i32_0 : i32, i32
  }
  func.func @transform_2(%arg0: i32) -> (i32, i32) {
    %c0_i32 = arith.constant 0 : i32
    %c0_i32_0 = arith.constant 0 : i32
    %c0_i32_1 = arith.constant 0 : i32
    return %c0_i32, %c0_i32_0 : i32, i32
  }
  func.func @transform_3(%arg0: i32) -> (i32, i32) {
    %c0_i32 = arith.constant 0 : i32
    %c0_i32_0 = arith.constant 0 : i32
    return %arg0, %c0_i32 : i32, i32
  }
  func.func @transform_4(%arg0: i32) -> (i32, i32, i32) {
    %c0_i32 = arith.constant 0 : i32
    %c0_i32_0 = arith.constant 0 : i32
    %c0_i32_1 = arith.constant 0 : i32
    return %arg0, %c0_i32, %c0_i32_0 : i32, i32, i32
  }
  func.func @transform_5(%arg0: i32) -> (i32, i32, i32) {
    %c0_i32 = arith.constant 0 : i32
    %c0_i32_0 = arith.constant 0 : i32
    %c0_i32_1 = arith.constant 0 : i32
    return %arg0, %c0_i32, %c0_i32_0 : i32, i32, i32
  }
}

module attributes {stable_mosaic.version = 11 : i64} {
  func.func @_bn_relu_tconv_kernel(%arg0: i32, %arg1: i32, %arg2: memref<1x4x64x14xf32, #tpu.memory_space<vmem>>, %arg3: memref<1x14xf32, #tpu.memory_space<vmem>>, %arg4: memref<1x14xf32, #tpu.memory_space<vmem>>, %arg5: memref<3x14x8xf32, #tpu.memory_space<vmem>>, %arg6: memref<1x8xf32, #tpu.memory_space<vmem>>, %arg7: memref<1x4x64x8xf32, #tpu.memory_space<vmem>>) attributes {dimension_semantics = [#tpu.dimension_semantics<parallel>, #tpu.dimension_semantics<parallel>], iteration_bounds = array<i64: 2, 1>, scalar_prefetch = 0 : i64, scratch_operands = 0 : i64, tpu.core_type = #tpu.core_type<tc>, window_params = [{transform_indices = @transform_0, window_bounds = array<i64: 1, 4, 64, 14>}, {pipeline_mode = #tpu.pipeline_mode<synchronous>, transform_indices = @transform_1, window_bounds = array<i64: 1, 14>}, {pipeline_mode = #tpu.pipeline_mode<synchronous>, transform_indices = @transform_2, window_bounds = array<i64: 1, 14>}, {pipeline_mode = #tpu.pipeline_mode<synchronous>, transform_indices = @transform_3, window_bounds = array<i64: 3, 14, 8>}, {pipeline_mode = #tpu.pipeline_mode<synchronous>, transform_indices = @transform_4, window_bounds = array<i64: 1, 8>}, {transform_indices = @transform_5, window_bounds = array<i64: 1, 4, 64, 8>}]} {
    %c0 = arith.constant 0 : index
    %c0_0 = arith.constant 0 : index
    %0 = vector.load %arg3[%c0, %c0_0] : memref<1x14xf32, #tpu.memory_space<vmem>>, vector<1x14xf32>
    %c0_1 = arith.constant 0 : index
    %c0_2 = arith.constant 0 : index
    %1 = vector.load %arg4[%c0_1, %c0_2] : memref<1x14xf32, #tpu.memory_space<vmem>>, vector<1x14xf32>
    %c0_3 = arith.constant 0 : index
    %c0_4 = arith.constant 0 : index
    %2 = vector.load %arg6[%c0_3, %c0_4] : memref<1x8xf32, #tpu.memory_space<vmem>>, vector<1x8xf32>
    %c0_5 = arith.constant 0 : index
    %c0_6 = arith.constant 0 : index
    %c0_7 = arith.constant 0 : index
    %c0_8 = arith.constant 0 : index
    %3 = vector.load %arg2[%c0_5, %c0_6, %c0_7, %c0_8] : memref<1x4x64x14xf32, #tpu.memory_space<vmem>>, vector<1x1x64x14xf32>
    %4 = vector.shape_cast %3 : vector<1x1x64x14xf32> to vector<64x14xf32>
    %5 = vector.broadcast %0 : vector<1x14xf32> to vector<64x14xf32>
    %6 = arith.mulf %4, %5 : vector<64x14xf32>
    %7 = vector.broadcast %1 : vector<1x14xf32> to vector<64x14xf32>
    %8 = arith.addf %6, %7 : vector<64x14xf32>
    %cst = arith.constant 0.000000e+00 : f32
    %9 = vector.broadcast %cst : f32 to vector<64x14xf32>
    %10 = arith.maximumf %8, %9 : vector<64x14xf32>
    %c1 = arith.constant 1 : index
    %c0_9 = arith.constant 0 : index
    %c0_10 = arith.constant 0 : index
    %11 = vector.load %arg5[%c1, %c0_9, %c0_10] : memref<3x14x8xf32, #tpu.memory_space<vmem>>, vector<1x14x8xf32>
    %12 = vector.shape_cast %11 : vector<1x14x8xf32> to vector<14x8xf32>
    %cst_11 = arith.constant dense<0.000000e+00> : vector<64x8xf32>
    %13 = tpu.matmul %10, %12, %cst_11 {dimension_numbers = #tpu.dot_dimension_numbers<[1], [0], [0], [1], [0, 0, 1, 1], [], []>} : vector<64x14xf32>, vector<14x8xf32>, vector<64x8xf32> -> vector<64x8xf32>
    %c0_12 = arith.constant 0 : index
    %c1_13 = arith.constant 1 : index
    %c0_14 = arith.constant 0 : index
    %c0_15 = arith.constant 0 : index
    %14 = vector.load %arg2[%c0_12, %c1_13, %c0_14, %c0_15] : memref<1x4x64x14xf32, #tpu.memory_space<vmem>>, vector<1x1x64x14xf32>
    %15 = vector.shape_cast %14 : vector<1x1x64x14xf32> to vector<64x14xf32>
    %16 = vector.broadcast %0 : vector<1x14xf32> to vector<64x14xf32>
    %17 = arith.mulf %15, %16 : vector<64x14xf32>
    %18 = vector.broadcast %1 : vector<1x14xf32> to vector<64x14xf32>
    %19 = arith.addf %17, %18 : vector<64x14xf32>
    %cst_16 = arith.constant 0.000000e+00 : f32
    %20 = vector.broadcast %cst_16 : f32 to vector<64x14xf32>
    %21 = arith.maximumf %19, %20 : vector<64x14xf32>
    %c2 = arith.constant 2 : index
    %c0_17 = arith.constant 0 : index
    %c0_18 = arith.constant 0 : index
    %22 = vector.load %arg5[%c2, %c0_17, %c0_18] : memref<3x14x8xf32, #tpu.memory_space<vmem>>, vector<1x14x8xf32>
    %23 = vector.shape_cast %22 : vector<1x14x8xf32> to vector<14x8xf32>
    %cst_19 = arith.constant dense<0.000000e+00> : vector<64x8xf32>
    %24 = tpu.matmul %21, %23, %cst_19 {dimension_numbers = #tpu.dot_dimension_numbers<[1], [0], [0], [1], [0, 0, 1, 1], [], []>} : vector<64x14xf32>, vector<14x8xf32>, vector<64x8xf32> -> vector<64x8xf32>
    %25 = arith.addf %13, %24 : vector<64x8xf32>
    %26 = vector.broadcast %2 : vector<1x8xf32> to vector<64x8xf32>
    %27 = arith.addf %25, %26 : vector<64x8xf32>
    %c0_20 = arith.constant 0 : index
    %c0_21 = arith.constant 0 : index
    %c0_22 = arith.constant 0 : index
    %c0_23 = arith.constant 0 : index
    %28 = vector.load %arg7[%c0_20, %c0_21, %c0_22, %c0_23] : memref<1x4x64x8xf32, #tpu.memory_space<vmem>>, vector<1x1x64x8xf32>
    %29 = vector.shape_cast %28 : vector<1x1x64x8xf32> to vector<64x8xf32>
    %30 = vector.shape_cast %27 : vector<64x8xf32> to vector<1x1x64x8xf32>
    tpu.vector_store %arg7[%c0_20, %c0_21, %c0_22, %c0_23], %30 {strides = array<i32>} : memref<1x4x64x8xf32, #tpu.memory_space<vmem>>, vector<1x1x64x8xf32>,
    %c0_24 = arith.constant 0 : index
    %c0_25 = arith.constant 0 : index
    %c0_26 = arith.constant 0 : index
    %c0_27 = arith.constant 0 : index
    %31 = vector.load %arg2[%c0_24, %c0_25, %c0_26, %c0_27] : memref<1x4x64x14xf32, #tpu.memory_space<vmem>>, vector<1x1x64x14xf32>
    %32 = vector.shape_cast %31 : vector<1x1x64x14xf32> to vector<64x14xf32>
    %33 = vector.broadcast %0 : vector<1x14xf32> to vector<64x14xf32>
    %34 = arith.mulf %32, %33 : vector<64x14xf32>
    %35 = vector.broadcast %1 : vector<1x14xf32> to vector<64x14xf32>
    %36 = arith.addf %34, %35 : vector<64x14xf32>
    %cst_28 = arith.constant 0.000000e+00 : f32
    %37 = vector.broadcast %cst_28 : f32 to vector<64x14xf32>
    %38 = arith.maximumf %36, %37 : vector<64x14xf32>
    %c0_29 = arith.constant 0 : index
    %c0_30 = arith.constant 0 : index
    %c0_31 = arith.constant 0 : index
    %39 = vector.load %arg5[%c0_29, %c0_30, %c0_31] : memref<3x14x8xf32, #tpu.memory_space<vmem>>, vector<1x14x8xf32>
    %40 = vector.shape_cast %39 : vector<1x14x8xf32> to vector<14x8xf32>
    %cst_32 = arith.constant dense<0.000000e+00> : vector<64x8xf32>
    %41 = tpu.matmul %38, %40, %cst_32 {dimension_numbers = #tpu.dot_dimension_numbers<[1], [0], [0], [1], [0, 0, 1, 1], [], []>} : vector<64x14xf32>, vector<14x8xf32>, vector<64x8xf32> -> vector<64x8xf32>
    %c0_33 = arith.constant 0 : index
    %c1_34 = arith.constant 1 : index
    %c0_35 = arith.constant 0 : index
    %c0_36 = arith.constant 0 : index
    %42 = vector.load %arg2[%c0_33, %c1_34, %c0_35, %c0_36] : memref<1x4x64x14xf32, #tpu.memory_space<vmem>>, vector<1x1x64x14xf32>
    %43 = vector.shape_cast %42 : vector<1x1x64x14xf32> to vector<64x14xf32>
    %44 = vector.broadcast %0 : vector<1x14xf32> to vector<64x14xf32>
    %45 = arith.mulf %43, %44 : vector<64x14xf32>
    %46 = vector.broadcast %1 : vector<1x14xf32> to vector<64x14xf32>
    %47 = arith.addf %45, %46 : vector<64x14xf32>
    %cst_37 = arith.constant 0.000000e+00 : f32
    %48 = vector.broadcast %cst_37 : f32 to vector<64x14xf32>
    %49 = arith.maximumf %47, %48 : vector<64x14xf32>
    %c1_38 = arith.constant 1 : index
    %c0_39 = arith.constant 0 : index
    %c0_40 = arith.constant 0 : index
    %50 = vector.load %arg5[%c1_38, %c0_39, %c0_40] : memref<3x14x8xf32, #tpu.memory_space<vmem>>, vector<1x14x8xf32>
    %51 = vector.shape_cast %50 : vector<1x14x8xf32> to vector<14x8xf32>
    %cst_41 = arith.constant dense<0.000000e+00> : vector<64x8xf32>
    %52 = tpu.matmul %49, %51, %cst_41 {dimension_numbers = #tpu.dot_dimension_numbers<[1], [0], [0], [1], [0, 0, 1, 1], [], []>} : vector<64x14xf32>, vector<14x8xf32>, vector<64x8xf32> -> vector<64x8xf32>
    %53 = arith.addf %41, %52 : vector<64x8xf32>
    %c0_42 = arith.constant 0 : index
    %c2_43 = arith.constant 2 : index
    %c0_44 = arith.constant 0 : index
    %c0_45 = arith.constant 0 : index
    %54 = vector.load %arg2[%c0_42, %c2_43, %c0_44, %c0_45] : memref<1x4x64x14xf32, #tpu.memory_space<vmem>>, vector<1x1x64x14xf32>
    %55 = vector.shape_cast %54 : vector<1x1x64x14xf32> to vector<64x14xf32>
    %56 = vector.broadcast %0 : vector<1x14xf32> to vector<64x14xf32>
    %57 = arith.mulf %55, %56 : vector<64x14xf32>
    %58 = vector.broadcast %1 : vector<1x14xf32> to vector<64x14xf32>
    %59 = arith.addf %57, %58 : vector<64x14xf32>
    %cst_46 = arith.constant 0.000000e+00 : f32
    %60 = vector.broadcast %cst_46 : f32 to vector<64x14xf32>
    %61 = arith.maximumf %59, %60 : vector<64x14xf32>
    %c2_47 = arith.constant 2 : index
    %c0_48 = arith.constant 0 : index
    %c0_49 = arith.constant 0 : index
    %62 = vector.load %arg5[%c2_47, %c0_48, %c0_49] : memref<3x14x8xf32, #tpu.memory_space<vmem>>, vector<1x14x8xf32>
    %63 = vector.shape_cast %62 : vector<1x14x8xf32> to vector<14x8xf32>
    %cst_50 = arith.constant dense<0.000000e+00> : vector<64x8xf32>
    %64 = tpu.matmul %61, %63, %cst_50 {dimension_numbers = #tpu.dot_dimension_numbers<[1], [0], [0], [1], [0, 0, 1, 1], [], []>} : vector<64x14xf32>, vector<14x8xf32>, vector<64x8xf32> -> vector<64x8xf32>
    %65 = arith.addf %53, %64 : vector<64x8xf32>
    %66 = vector.broadcast %2 : vector<1x8xf32> to vector<64x8xf32>
    %67 = arith.addf %65, %66 : vector<64x8xf32>
    %c0_51 = arith.constant 0 : index
    %c1_52 = arith.constant 1 : index
    %c0_53 = arith.constant 0 : index
    %c0_54 = arith.constant 0 : index
    %68 = vector.load %arg7[%c0_51, %c1_52, %c0_53, %c0_54] : memref<1x4x64x8xf32, #tpu.memory_space<vmem>>, vector<1x1x64x8xf32>
    %69 = vector.shape_cast %68 : vector<1x1x64x8xf32> to vector<64x8xf32>
    %70 = vector.shape_cast %67 : vector<64x8xf32> to vector<1x1x64x8xf32>
    tpu.vector_store %arg7[%c0_51, %c1_52, %c0_53, %c0_54], %70 {strides = array<i32>} : memref<1x4x64x8xf32, #tpu.memory_space<vmem>>, vector<1x1x64x8xf32>,
    %c0_55 = arith.constant 0 : index
    %c1_56 = arith.constant 1 : index
    %c0_57 = arith.constant 0 : index
    %c0_58 = arith.constant 0 : index
    %71 = vector.load %arg2[%c0_55, %c1_56, %c0_57, %c0_58] : memref<1x4x64x14xf32, #tpu.memory_space<vmem>>, vector<1x1x64x14xf32>
    %72 = vector.shape_cast %71 : vector<1x1x64x14xf32> to vector<64x14xf32>
    %73 = vector.broadcast %0 : vector<1x14xf32> to vector<64x14xf32>
    %74 = arith.mulf %72, %73 : vector<64x14xf32>
    %75 = vector.broadcast %1 : vector<1x14xf32> to vector<64x14xf32>
    %76 = arith.addf %74, %75 : vector<64x14xf32>
    %cst_59 = arith.constant 0.000000e+00 : f32
    %77 = vector.broadcast %cst_59 : f32 to vector<64x14xf32>
    %78 = arith.maximumf %76, %77 : vector<64x14xf32>
    %c0_60 = arith.constant 0 : index
    %c0_61 = arith.constant 0 : index
    %c0_62 = arith.constant 0 : index
    %79 = vector.load %arg5[%c0_60, %c0_61, %c0_62] : memref<3x14x8xf32, #tpu.memory_space<vmem>>, vector<1x14x8xf32>
    %80 = vector.shape_cast %79 : vector<1x14x8xf32> to vector<14x8xf32>
    %cst_63 = arith.constant dense<0.000000e+00> : vector<64x8xf32>
    %81 = tpu.matmul %78, %80, %cst_63 {dimension_numbers = #tpu.dot_dimension_numbers<[1], [0], [0], [1], [0, 0, 1, 1], [], []>} : vector<64x14xf32>, vector<14x8xf32>, vector<64x8xf32> -> vector<64x8xf32>
    %c0_64 = arith.constant 0 : index
    %c2_65 = arith.constant 2 : index
    %c0_66 = arith.constant 0 : index
    %c0_67 = arith.constant 0 : index
    %82 = vector.load %arg2[%c0_64, %c2_65, %c0_66, %c0_67] : memref<1x4x64x14xf32, #tpu.memory_space<vmem>>, vector<1x1x64x14xf32>
    %83 = vector.shape_cast %82 : vector<1x1x64x14xf32> to vector<64x14xf32>
    %84 = vector.broadcast %0 : vector<1x14xf32> to vector<64x14xf32>
    %85 = arith.mulf %83, %84 : vector<64x14xf32>
    %86 = vector.broadcast %1 : vector<1x14xf32> to vector<64x14xf32>
    %87 = arith.addf %85, %86 : vector<64x14xf32>
    %cst_68 = arith.constant 0.000000e+00 : f32
    %88 = vector.broadcast %cst_68 : f32 to vector<64x14xf32>
    %89 = arith.maximumf %87, %88 : vector<64x14xf32>
    %c1_69 = arith.constant 1 : index
    %c0_70 = arith.constant 0 : index
    %c0_71 = arith.constant 0 : index
    %90 = vector.load %arg5[%c1_69, %c0_70, %c0_71] : memref<3x14x8xf32, #tpu.memory_space<vmem>>, vector<1x14x8xf32>
    %91 = vector.shape_cast %90 : vector<1x14x8xf32> to vector<14x8xf32>
    %cst_72 = arith.constant dense<0.000000e+00> : vector<64x8xf32>
    %92 = tpu.matmul %89, %91, %cst_72 {dimension_numbers = #tpu.dot_dimension_numbers<[1], [0], [0], [1], [0, 0, 1, 1], [], []>} : vector<64x14xf32>, vector<14x8xf32>, vector<64x8xf32> -> vector<64x8xf32>
    %93 = arith.addf %81, %92 : vector<64x8xf32>
    %c0_73 = arith.constant 0 : index
    %c3 = arith.constant 3 : index
    %c0_74 = arith.constant 0 : index
    %c0_75 = arith.constant 0 : index
    %94 = vector.load %arg2[%c0_73, %c3, %c0_74, %c0_75] : memref<1x4x64x14xf32, #tpu.memory_space<vmem>>, vector<1x1x64x14xf32>
    %95 = vector.shape_cast %94 : vector<1x1x64x14xf32> to vector<64x14xf32>
    %96 = vector.broadcast %0 : vector<1x14xf32> to vector<64x14xf32>
    %97 = arith.mulf %95, %96 : vector<64x14xf32>
    %98 = vector.broadcast %1 : vector<1x14xf32> to vector<64x14xf32>
    %99 = arith.addf %97, %98 : vector<64x14xf32>
    %cst_76 = arith.constant 0.000000e+00 : f32
    %100 = vector.broadcast %cst_76 : f32 to vector<64x14xf32>
    %101 = arith.maximumf %99, %100 : vector<64x14xf32>
    %c2_77 = arith.constant 2 : index
    %c0_78 = arith.constant 0 : index
    %c0_79 = arith.constant 0 : index
    %102 = vector.load %arg5[%c2_77, %c0_78, %c0_79] : memref<3x14x8xf32, #tpu.memory_space<vmem>>, vector<1x14x8xf32>
    %103 = vector.shape_cast %102 : vector<1x14x8xf32> to vector<14x8xf32>
    %cst_80 = arith.constant dense<0.000000e+00> : vector<64x8xf32>
    %104 = tpu.matmul %101, %103, %cst_80 {dimension_numbers = #tpu.dot_dimension_numbers<[1], [0], [0], [1], [0, 0, 1, 1], [], []>} : vector<64x14xf32>, vector<14x8xf32>, vector<64x8xf32> -> vector<64x8xf32>
    %105 = arith.addf %93, %104 : vector<64x8xf32>
    %106 = vector.broadcast %2 : vector<1x8xf32> to vector<64x8xf32>
    %107 = arith.addf %105, %106 : vector<64x8xf32>
    %c0_81 = arith.constant 0 : index
    %c2_82 = arith.constant 2 : index
    %c0_83 = arith.constant 0 : index
    %c0_84 = arith.constant 0 : index
    %108 = vector.load %arg7[%c0_81, %c2_82, %c0_83, %c0_84] : memref<1x4x64x8xf32, #tpu.memory_space<vmem>>, vector<1x1x64x8xf32>
    %109 = vector.shape_cast %108 : vector<1x1x64x8xf32> to vector<64x8xf32>
    %110 = vector.shape_cast %107 : vector<64x8xf32> to vector<1x1x64x8xf32>
    tpu.vector_store %arg7[%c0_81, %c2_82, %c0_83, %c0_84], %110 {strides = array<i32>} : memref<1x4x64x8xf32, #tpu.memory_space<vmem>>, vector<1x1x64x8xf32>,
    %c0_85 = arith.constant 0 : index
    %c2_86 = arith.constant 2 : index
    %c0_87 = arith.constant 0 : index
    %c0_88 = arith.constant 0 : index
    %111 = vector.load %arg2[%c0_85, %c2_86, %c0_87, %c0_88] : memref<1x4x64x14xf32, #tpu.memory_space<vmem>>, vector<1x1x64x14xf32>
    %112 = vector.shape_cast %111 : vector<1x1x64x14xf32> to vector<64x14xf32>
    %113 = vector.broadcast %0 : vector<1x14xf32> to vector<64x14xf32>
    %114 = arith.mulf %112, %113 : vector<64x14xf32>
    %115 = vector.broadcast %1 : vector<1x14xf32> to vector<64x14xf32>
    %116 = arith.addf %114, %115 : vector<64x14xf32>
    %cst_89 = arith.constant 0.000000e+00 : f32
    %117 = vector.broadcast %cst_89 : f32 to vector<64x14xf32>
    %118 = arith.maximumf %116, %117 : vector<64x14xf32>
    %c0_90 = arith.constant 0 : index
    %c0_91 = arith.constant 0 : index
    %c0_92 = arith.constant 0 : index
    %119 = vector.load %arg5[%c0_90, %c0_91, %c0_92] : memref<3x14x8xf32, #tpu.memory_space<vmem>>, vector<1x14x8xf32>
    %120 = vector.shape_cast %119 : vector<1x14x8xf32> to vector<14x8xf32>
    %cst_93 = arith.constant dense<0.000000e+00> : vector<64x8xf32>
    %121 = tpu.matmul %118, %120, %cst_93 {dimension_numbers = #tpu.dot_dimension_numbers<[1], [0], [0], [1], [0, 0, 1, 1], [], []>} : vector<64x14xf32>, vector<14x8xf32>, vector<64x8xf32> -> vector<64x8xf32>
    %c0_94 = arith.constant 0 : index
    %c3_95 = arith.constant 3 : index
    %c0_96 = arith.constant 0 : index
    %c0_97 = arith.constant 0 : index
    %122 = vector.load %arg2[%c0_94, %c3_95, %c0_96, %c0_97] : memref<1x4x64x14xf32, #tpu.memory_space<vmem>>, vector<1x1x64x14xf32>
    %123 = vector.shape_cast %122 : vector<1x1x64x14xf32> to vector<64x14xf32>
    %124 = vector.broadcast %0 : vector<1x14xf32> to vector<64x14xf32>
    %125 = arith.mulf %123, %124 : vector<64x14xf32>
    %126 = vector.broadcast %1 : vector<1x14xf32> to vector<64x14xf32>
    %127 = arith.addf %125, %126 : vector<64x14xf32>
    %cst_98 = arith.constant 0.000000e+00 : f32
    %128 = vector.broadcast %cst_98 : f32 to vector<64x14xf32>
    %129 = arith.maximumf %127, %128 : vector<64x14xf32>
    %c1_99 = arith.constant 1 : index
    %c0_100 = arith.constant 0 : index
    %c0_101 = arith.constant 0 : index
    %130 = vector.load %arg5[%c1_99, %c0_100, %c0_101] : memref<3x14x8xf32, #tpu.memory_space<vmem>>, vector<1x14x8xf32>
    %131 = vector.shape_cast %130 : vector<1x14x8xf32> to vector<14x8xf32>
    %cst_102 = arith.constant dense<0.000000e+00> : vector<64x8xf32>
    %132 = tpu.matmul %129, %131, %cst_102 {dimension_numbers = #tpu.dot_dimension_numbers<[1], [0], [0], [1], [0, 0, 1, 1], [], []>} : vector<64x14xf32>, vector<14x8xf32>, vector<64x8xf32> -> vector<64x8xf32>
    %133 = arith.addf %121, %132 : vector<64x8xf32>
    %134 = vector.broadcast %2 : vector<1x8xf32> to vector<64x8xf32>
    %135 = arith.addf %133, %134 : vector<64x8xf32>
    %c0_103 = arith.constant 0 : index
    %c3_104 = arith.constant 3 : index
    %c0_105 = arith.constant 0 : index
    %c0_106 = arith.constant 0 : index
    %136 = vector.load %arg7[%c0_103, %c3_104, %c0_105, %c0_106] : memref<1x4x64x8xf32, #tpu.memory_space<vmem>>, vector<1x1x64x8xf32>
    %137 = vector.shape_cast %136 : vector<1x1x64x8xf32> to vector<64x8xf32>
    %138 = vector.shape_cast %135 : vector<64x8xf32> to vector<1x1x64x8xf32>
    tpu.vector_store %arg7[%c0_103, %c3_104, %c0_105, %c0_106], %138 {strides = array<i32>} : memref<1x4x64x8xf32, #tpu.memory_space<vmem>>, vector<1x1x64x8xf32>,
    return
  }
  func.func @transform_0(%arg0: i32, %arg1: i32) -> (i32, i32, i32, i32) {
    %c0_i32 = arith.constant 0 : i32
    %c0_i32_0 = arith.constant 0 : i32
    %c0_i32_1 = arith.constant 0 : i32
    return %arg0, %c0_i32, %arg1, %c0_i32_0 : i32, i32, i32, i32
  }
  func.func @transform_1(%arg0: i32, %arg1: i32) -> (i32, i32) {
    %c0_i32 = arith.constant 0 : i32
    %c0_i32_0 = arith.constant 0 : i32
    %c0_i32_1 = arith.constant 0 : i32
    return %c0_i32, %c0_i32_0 : i32, i32
  }
  func.func @transform_2(%arg0: i32, %arg1: i32) -> (i32, i32) {
    %c0_i32 = arith.constant 0 : i32
    %c0_i32_0 = arith.constant 0 : i32
    %c0_i32_1 = arith.constant 0 : i32
    return %c0_i32, %c0_i32_0 : i32, i32
  }
  func.func @transform_3(%arg0: i32, %arg1: i32) -> (i32, i32, i32) {
    %c0_i32 = arith.constant 0 : i32
    %c0_i32_0 = arith.constant 0 : i32
    %c0_i32_1 = arith.constant 0 : i32
    %c0_i32_2 = arith.constant 0 : i32
    return %c0_i32, %c0_i32_0, %c0_i32_1 : i32, i32, i32
  }
  func.func @transform_4(%arg0: i32, %arg1: i32) -> (i32, i32) {
    %c0_i32 = arith.constant 0 : i32
    %c0_i32_0 = arith.constant 0 : i32
    %c0_i32_1 = arith.constant 0 : i32
    return %c0_i32, %c0_i32_0 : i32, i32
  }
  func.func @transform_5(%arg0: i32, %arg1: i32) -> (i32, i32, i32, i32) {
    %c0_i32 = arith.constant 0 : i32
    %c0_i32_0 = arith.constant 0 : i32
    %c0_i32_1 = arith.constant 0 : i32
    return %arg0, %c0_i32, %arg1, %c0_i32_0 : i32, i32, i32, i32
  }
}

</mosaic_0001>

<llo_original>
// kernel: r2plus1d_block.2
$region0: #{r2plus1d_block.2}
  #allocation0 [shape = 'u32[]', space=smem, size = 0x4, offset = 0x4, fixed_abs, tag = 'smem constant byte address 0x4 - core index']
  #allocation1 [shape = 'u32[72,128]{1,0:T(1,128)}', space=vmem, size = 0x9000, scoped, tag = 'internal scratch']
  %s0 = inlined_call_operand.vmem [shape: f32[512,36], index: 0, kind: input, shape index: {}]
  %s1 = inlined_call_operand.vmem [shape: f32[36,14], index: 1, kind: input, shape index: {}]
  %s2 = inlined_call_operand.vmem [shape: f32[1,14], index: 2, kind: input, shape index: {}]
  %s3 = inlined_call_operand.vmem [shape: f32[512,14], index: 3, kind: output, shape index: {0}]
  %s4 = inlined_call_operand.vmem [shape: f32[1,1,14], index: 4, kind: output, shape index: {1}]
  %s5 = inlined_call_operand.vmem [shape: f32[1,1,14], index: 5, kind: output, shape index: {2}]
  %6 = xla_tuple %s3, %s4, %s5
  %s7 = sld [smem:[#allocation0]]
  $region38: #{r2plus1d_block.2} parent=0
    _
  %s9 = ssub.s32 1, %s7
  %s10 = scalar_select 0, %s9, %s7
  // Predicated region
  $region2: #{r2plus1d_block.2} parent=0 // pred_check
    _
  $region3: #{r2plus1d_block.2} parent=0 // pred_check_branch
    %12 = sbr.rel (0) target = $region5
  $region4: #{r2plus1d_block.2} parent=0 // pred_region
    _
  $region5: #{r2plus1d_block.2} parent=0 // pred_fallthru
    _
  // Predicated region
  $region6: #{r2plus1d_block.2} parent=0 // pred_check
    _
  $region7: #{r2plus1d_block.2} parent=0 // pred_check_branch
    %14 = sbr.rel (0) target = $region9
  $region8: #{r2plus1d_block.2} parent=0 // pred_region
    _
  $region9: #{r2plus1d_block.2} parent=0 // pred_fallthru
    _
  // Predicated region
  $region10: #{r2plus1d_block.2} parent=0 // pred_check
    _
  $region11: #{r2plus1d_block.2} parent=0 // pred_check_branch
    %16 = sbr.rel (0) target = $region13
  $region12: #{r2plus1d_block.2} parent=0 // pred_region
    _
  $region13: #{r2plus1d_block.2} parent=0 // pred_fallthru
    _
  %v17 = vld [vmem:[%s0] sm:$0xff]
  %v18 = vld [vmem:[%s0 + $0x8] sm:$0xff]
  %v19 = vld [vmem:[%s0 + $0x10] sm:$0xff]
  %v20 = vld [vmem:[%s0 + $0x18] sm:$0xff]
  %v21 = vld [vmem:[%s0 + $0x20] sm:$0xff]
  %v22 = vld [vmem:[%s0 + $0x28] sm:$0xff]
  %v23 = vld [vmem:[%s0 + $0x30] sm:$0xff]
  %v24 = vld [vmem:[%s0 + $0x38] sm:$0xff]
  %v25 = vld [vmem:[%s0 + $0x40] sm:$0xff]
  %v26 = vld [vmem:[%s0 + $0x48] sm:$0xff]
  %v27 = vld [vmem:[%s0 + $0x50] sm:$0xff]
  %v28 = vld [vmem:[%s0 + $0x58] sm:$0xff]
  %v29 = vld [vmem:[%s0 + $0x60] sm:$0xff]
  %v30 = vld [vmem:[%s0 + $0x68] sm:$0xff]
  %v31 = vld [vmem:[%s0 + $0x70] sm:$0xff]
  %v32 = vld [vmem:[%s0 + $0x78] sm:$0xff]
  %v33 = vld [vmem:[%s0 + $0x80] sm:$0xff]
  %v34 = vld [vmem:[%s0 + $0x88] sm:$0xff]
  %v35 = vld [vmem:[%s0 + $0x90] sm:$0xff]
  %v36 = vld [vmem:[%s0 + $0x98] sm:$0xff]
  %v37 = vld [vmem:[%s0 + $0xa0] sm:$0xff]
  %v38 = vld [vmem:[%s0 + $0xa8] sm:$0xff]
  %v39 = vld [vmem:[%s0 + $0xb0] sm:$0xff]
  %v40 = vld [vmem:[%s0 + $0xb8] sm:$0xff]
  %v41 = vld [vmem:[%s0 + $0xc0] sm:$0xff]
  %v42 = vld [vmem:[%s0 + $0xc8] sm:$0xff]
  %v43 = vld [vmem:[%s0 + $0xd0] sm:$0xff]
  %v44 = vld [vmem:[%s0 + $0xd8] sm:$0xff]
  %v45 = vld [vmem:[%s0 + $0xe0] sm:$0xff]
  %v46 = vld [vmem:[%s0 + $0xe8] sm:$0xff]
  %v47 = vld [vmem:[%s0 + $0xf0] sm:$0xff]
  %v48 = vld [vmem:[%s0 + $0xf8] sm:$0xff]
  %v49 = vld [vmem:[%s0 + $0x100] sm:$0xff]
  %v50 = vld [vmem:[%s0 + $0x108] sm:$0xff]
  %v51 = vld [vmem:[%s0 + $0x110] sm:$0xff]
  %v52 = vld [vmem:[%s0 + $0x118] sm:$0xff]
  %v53 = vld [vmem:[%s0 + $0x120] sm:$0xff]
  %v54 = vld [vmem:[%s0 + $0x128] sm:$0xff]
  %v55 = vld [vmem:[%s0 + $0x130] sm:$0xff]
  %v56 = vld [vmem:[%s0 + $0x138] sm:$0xff]
  %v57 = vld [vmem:[%s0 + $0x140] sm:$0xff]
  %v58 = vld [vmem:[%s0 + $0x148] sm:$0xff]
  %v59 = vld [vmem:[%s0 + $0x150] sm:$0xff]
  %v60 = vld [vmem:[%s0 + $0x158] sm:$0xff]
  %v61 = vld [vmem:[%s0 + $0x160] sm:$0xff]
  %v62 = vld [vmem:[%s0 + $0x168] sm:$0xff]
  %v63 = vld [vmem:[%s0 + $0x170] sm:$0xff]
  %v64 = vld [vmem:[%s0 + $0x178] sm:$0xff]
  %v65 = vld [vmem:[%s0 + $0x180] sm:$0xff]
  %v66 = vld [vmem:[%s0 + $0x188] sm:$0xff]
  %v67 = vld [vmem:[%s0 + $0x190] sm:$0xff]
  %v68 = vld [vmem:[%s0 + $0x198] sm:$0xff]
  %v69 = vld [vmem:[%s0 + $0x1a0] sm:$0xff]
  %v70 = vld [vmem:[%s0 + $0x1a8] sm:$0xff]
  %v71 = vld [vmem:[%s0 + $0x1b0] sm:$0xff]
  %v72 = vld [vmem:[%s0 + $0x1b8] sm:$0xff]
  %v73 = vld [vmem:[%s0 + $0x1c0] sm:$0xff]
  %v74 = vld [vmem:[%s0 + $0x1c8] sm:$0xff]
  %v75 = vld [vmem:[%s0 + $0x1d0] sm:$0xff]
  %v76 = vld [vmem:[%s0 + $0x1d8] sm:$0xff]
  %v77 = vld [vmem:[%s0 + $0x1e0] sm:$0xff]
  %v78 = vld [vmem:[%s0 + $0x1e8] sm:$0xff]
  %v79 = vld [vmem:[%s0 + $0x1f0] sm:$0xff]
  %v80 = vld [vmem:[%s0 + $0x1f8] sm:$0xff]
  %v81 = vld [vmem:[%s1] sm:$0xff]
  %v82 = vld [vmem:[%s1 + $0x8] sm:$0xff]
  %v83 = vld [vmem:[%s1 + $0x10] sm:$0xff]
  %v84 = vld [vmem:[%s1 + $0x18] sm:$0xff]
  %v85 = vld [vmem:[%s1 + $0x20] sm:$0xf]
  %v86 = vld [vmem:[%s2] sm:$0x1]
  %v88 = vperm.slane %v86, 0
  %vm90 = vcmask 293888
  %v92 = vsel %vm90, %v17, 0
  %v95 = vsel %vm90, %v18, 0
  %v98 = vsel %vm90, %v19, 0
  %v101 = vsel %vm90, %v20, 0
  %v104 = vsel %vm90, %v21, 0
  %v107 = vsel %vm90, %v22, 0
  %v110 = vsel %vm90, %v23, 0
  %v113 = vsel %vm90, %v24, 0
  %v116 = vsel %vm90, %v25, 0
  %v119 = vsel %vm90, %v26, 0
  %v122 = vsel %vm90, %v27, 0
  %v125 = vsel %vm90, %v28, 0
  %v128 = vsel %vm90, %v29, 0
  %v131 = vsel %vm90, %v30, 0
  %v134 = vsel %vm90, %v31, 0
  %v137 = vsel %vm90, %v32, 0
  %v140 = vsel %vm90, %v33, 0
  %v143 = vsel %vm90, %v34, 0
  %v146 = vsel %vm90, %v35, 0
  %v149 = vsel %vm90, %v36, 0
  %v152 = vsel %vm90, %v37, 0
  %v155 = vsel %vm90, %v38, 0
  %v158 = vsel %vm90, %v39, 0
  %v161 = vsel %vm90, %v40, 0
  %v164 = vsel %vm90, %v41, 0
  %v167 = vsel %vm90, %v42, 0
  %v170 = vsel %vm90, %v43, 0
  %v173 = vsel %vm90, %v44, 0
  %v176 = vsel %vm90, %v45, 0
  %v179 = vsel %vm90, %v46, 0
  %v182 = vsel %vm90, %v47, 0
  %v185 = vsel %vm90, %v48, 0
  %v188 = vsel %vm90, %v49, 0
  %v191 = vsel %vm90, %v50, 0
  %v194 = vsel %vm90, %v51, 0
  %v197 = vsel %vm90, %v52, 0
  %v200 = vsel %vm90, %v53, 0
  %v203 = vsel %vm90, %v54, 0
  %v206 = vsel %vm90, %v55, 0
  %v209 = vsel %vm90, %v56, 0
  %v212 = vsel %vm90, %v57, 0
  %v215 = vsel %vm90, %v58, 0
  %v218 = vsel %vm90, %v59, 0
  %v221 = vsel %vm90, %v60, 0
  %v224 = vsel %vm90, %v61, 0
  %v227 = vsel %vm90, %v62, 0
  %v230 = vsel %vm90, %v63, 0
  %v233 = vsel %vm90, %v64, 0
  %v236 = vsel %vm90, %v65, 0
  %v239 = vsel %vm90, %v66, 0
  %v242 = vsel %vm90, %v67, 0
  %v245 = vsel %vm90, %v68, 0
  %v248 = vsel %vm90, %v69, 0
  %v251 = vsel %vm90, %v70, 0
  %v254 = vsel %vm90, %v71, 0
  %v257 = vsel %vm90, %v72, 0
  %v260 = vsel %vm90, %v73, 0
  %v263 = vsel %vm90, %v74, 0
  %v266 = vsel %vm90, %v75, 0
  %v269 = vsel %vm90, %v76, 0
  %v272 = vsel %vm90, %v77, 0
  %v275 = vsel %vm90, %v78, 0
  %v278 = vsel %vm90, %v79, 0
  %v281 = vsel %vm90, %v80, 0
  %vm283 = vcmask 1043456
  %v285 = vsel %vm283, %v85, 0
  %287 = vmatpush.msra.mxu0 0.0
  %288 = vmatpush.msra.mxu0 0.0
  %289 = vmatpush.msra.mxu0 0.0
  %290 = vmatpush.msra.mxu0 0.0
  %291 = vmatpush.msra.mxu0 0.0
  %292 = vmatpush.msra.mxu0 0.0
  %293 = vmatpush.msra.mxu0 0.0
  %294 = vmatpush.msra.mxu0 0.0
  %295 = vmatpush.msra.mxu0 0.0
  %296 = vmatpush.msra.mxu0 0.0
  %297 = vmatpush.msra.mxu0 0.0
  %298 = vmatpush.msra.mxu0 %v285
  %299 = vmatpush.msra.mxu0 %v84
  %300 = vmatpush.msra.mxu0 %v83
  %301 = vmatpush.msra.mxu0 %v82
  %302 = vmatpush.msra.mxu0 %v81
  %303 = vmatmul.f32.gmra.mxu0 %v92
  %v304 = vpop.f32.mrf.mxu0
  %v305 = vadd.f32 %v88, %v304
  %306 = vmatmul.f32.gmra.mxu0 %v95
  %v307 = vpop.f32.mrf.mxu0
  %v308 = vadd.f32 %v88, %v307
  %309 = vmatmul.f32.gmra.mxu0 %v98
  %v310 = vpop.f32.mrf.mxu0
  %v311 = vadd.f32 %v88, %v310
  %312 = vmatmul.f32.gmra.mxu0 %v101
  %v313 = vpop.f32.mrf.mxu0
  %v314 = vadd.f32 %v88, %v313
  %315 = vmatmul.f32.gmra.mxu0 %v104
  %v316 = vpop.f32.mrf.mxu0
  %v317 = vadd.f32 %v88, %v316
  %318 = vmatmul.f32.gmra.mxu0 %v107
  %v319 = vpop.f32.mrf.mxu0
  %v320 = vadd.f32 %v88, %v319
  %321 = vmatmul.f32.gmra.mxu0 %v110
  %v322 = vpop.f32.mrf.mxu0
  %v323 = vadd.f32 %v88, %v322
  %324 = vmatmul.f32.gmra.mxu0 %v113
  %v325 = vpop.f32.mrf.mxu0
  %v326 = vadd.f32 %v88, %v325
  %327 = vmatmul.f32.gmra.mxu0 %v116
  %v328 = vpop.f32.mrf.mxu0
  %v329 = vadd.f32 %v88, %v328
  %330 = vmatmul.f32.gmra.mxu0 %v119
  %v331 = vpop.f32.mrf.mxu0
  %v332 = vadd.f32 %v88, %v331
  %333 = vmatmul.f32.gmra.mxu0 %v122
  %v334 = vpop.f32.mrf.mxu0
  %v335 = vadd.f32 %v88, %v334
  %336 = vmatmul.f32.gmra.mxu0 %v125
  %v337 = vpop.f32.mrf.mxu0
  %v338 = vadd.f32 %v88, %v337
  %339 = vmatmul.f32.gmra.mxu0 %v128
  %v340 = vpop.f32.mrf.mxu0
  %v341 = vadd.f32 %v88, %v340
  %342 = vmatmul.f32.gmra.mxu0 %v131
  %v343 = vpop.f32.mrf.mxu0
  %v344 = vadd.f32 %v88, %v343
  %345 = vmatmul.f32.gmra.mxu0 %v134
  %v346 = vpop.f32.mrf.mxu0
  %v347 = vadd.f32 %v88, %v346
  %348 = vmatmul.f32.gmra.mxu0 %v137
  %v349 = vpop.f32.mrf.mxu0
  %v350 = vadd.f32 %v88, %v349
  %351 = vmatmul.f32.gmra.mxu0 %v140
  %v352 = vpop.f32.mrf.mxu0
  %v353 = vadd.f32 %v88, %v352
  %354 = vmatmul.f32.gmra.mxu0 %v143
  %v355 = vpop.f32.mrf.mxu0
  %v356 = vadd.f32 %v88, %v355
  %357 = vmatmul.f32.gmra.mxu0 %v146
  %v358 = vpop.f32.mrf.mxu0
  %v359 = vadd.f32 %v88, %v358
  %360 = vmatmul.f32.gmra.mxu0 %v149
  %v361 = vpop.f32.mrf.mxu0
  %v362 = vadd.f32 %v88, %v361
  %363 = vmatmul.f32.gmra.mxu0 %v152
  %v364 = vpop.f32.mrf.mxu0
  %v365 = vadd.f32 %v88, %v364
  %366 = vmatmul.f32.gmra.mxu0 %v155
  %v367 = vpop.f32.mrf.mxu0
  %v368 = vadd.f32 %v88, %v367
  %369 = vmatmul.f32.gmra.mxu0 %v158
  %v370 = vpop.f32.mrf.mxu0
  %v371 = vadd.f32 %v88, %v370
  %372 = vmatmul.f32.gmra.mxu0 %v161
  %v373 = vpop.f32.mrf.mxu0
  %v374 = vadd.f32 %v88, %v373
  %375 = vmatmul.f32.gmra.mxu0 %v164
  %v376 = vpop.f32.mrf.mxu0
  %v377 = vadd.f32 %v88, %v376
  %378 = vmatmul.f32.gmra.mxu0 %v167
  %v379 = vpop.f32.mrf.mxu0
  %v380 = vadd.f32 %v88, %v379
  %381 = vmatmul.f32.gmra.mxu0 %v170
  %v382 = vpop.f32.mrf.mxu0
  %v383 = vadd.f32 %v88, %v382
  %384 = vmatmul.f32.gmra.mxu0 %v173
  %v385 = vpop.f32.mrf.mxu0
  %v386 = vadd.f32 %v88, %v385
  %387 = vmatmul.f32.gmra.mxu0 %v176
  %v388 = vpop.f32.mrf.mxu0
  %v389 = vadd.f32 %v88, %v388
  %390 = vmatmul.f32.gmra.mxu0 %v179
  %v391 = vpop.f32.mrf.mxu0
  %v392 = vadd.f32 %v88, %v391
  %393 = vmatmul.f32.gmra.mxu0 %v182
  %v394 = vpop.f32.mrf.mxu0
  %v395 = vadd.f32 %v88, %v394
  %396 = vmatmul.f32.gmra.mxu0 %v185
  %v397 = vpop.f32.mrf.mxu0
  %v398 = vadd.f32 %v88, %v397
  %399 = vmatmul.f32.gmra.mxu0 %v188
  %v400 = vpop.f32.mrf.mxu0
  %v401 = vadd.f32 %v88, %v400
  %402 = vmatmul.f32.gmra.mxu0 %v191
  %v403 = vpop.f32.mrf.mxu0
  %v404 = vadd.f32 %v88, %v403
  %405 = vmatmul.f32.gmra.mxu0 %v194
  %v406 = vpop.f32.mrf.mxu0
  %v407 = vadd.f32 %v88, %v406
  %408 = vmatmul.f32.gmra.mxu0 %v197
  %v409 = vpop.f32.mrf.mxu0
  %v410 = vadd.f32 %v88, %v409
  %411 = vmatmul.f32.gmra.mxu0 %v200
  %v412 = vpop.f32.mrf.mxu0
  %v413 = vadd.f32 %v88, %v412
  %414 = vmatmul.f32.gmra.mxu0 %v203
  %v415 = vpop.f32.mrf.mxu0
  %v416 = vadd.f32 %v88, %v415
  %417 = vmatmul.f32.gmra.mxu0 %v206
  %v418 = vpop.f32.mrf.mxu0
  %v419 = vadd.f32 %v88, %v418
  %420 = vmatmul.f32.gmra.mxu0 %v209
  %v421 = vpop.f32.mrf.mxu0
  %v422 = vadd.f32 %v88, %v421
  %423 = vmatmul.f32.gmra.mxu0 %v212
  %v424 = vpop.f32.mrf.mxu0
  %v425 = vadd.f32 %v88, %v424
  %426 = vmatmul.f32.gmra.mxu0 %v215
  %v427 = vpop.f32.mrf.mxu0
  %v428 = vadd.f32 %v88, %v427
  %429 = vmatmul.f32.gmra.mxu0 %v218
  %v430 = vpop.f32.mrf.mxu0
  %v431 = vadd.f32 %v88, %v430
  %432 = vmatmul.f32.gmra.mxu0 %v221
  %v433 = vpop.f32.mrf.mxu0
  %v434 = vadd.f32 %v88, %v433
  %435 = vmatmul.f32.gmra.mxu0 %v224
  %v436 = vpop.f32.mrf.mxu0
  %v437 = vadd.f32 %v88, %v436
  %438 = vmatmul.f32.gmra.mxu0 %v227
  %v439 = vpop.f32.mrf.mxu0
  %v440 = vadd.f32 %v88, %v439
  %441 = vmatmul.f32.gmra.mxu0 %v230
  %v442 = vpop.f32.mrf.mxu0
  %v443 = vadd.f32 %v88, %v442
  %444 = vmatmul.f32.gmra.mxu0 %v233
  %v445 = vpop.f32.mrf.mxu0
  %v446 = vadd.f32 %v88, %v445
  %447 = vmatmul.f32.gmra.mxu0 %v236
  %v448 = vpop.f32.mrf.mxu0
  %v449 = vadd.f32 %v88, %v448
  %450 = vmatmul.f32.gmra.mxu0 %v239
  %v451 = vpop.f32.mrf.mxu0
  %v452 = vadd.f32 %v88, %v451
  %453 = vmatmul.f32.gmra.mxu0 %v242
  %v454 = vpop.f32.mrf.mxu0
  %v455 = vadd.f32 %v88, %v454
  %456 = vmatmul.f32.gmra.mxu0 %v245
  %v457 = vpop.f32.mrf.mxu0
  %v458 = vadd.f32 %v88, %v457
  %459 = vmatmul.f32.gmra.mxu0 %v248
  %v460 = vpop.f32.mrf.mxu0
  %v461 = vadd.f32 %v88, %v460
  %462 = vmatmul.f32.gmra.mxu0 %v251
  %v463 = vpop.f32.mrf.mxu0
  %v464 = vadd.f32 %v88, %v463
  %465 = vmatmul.f32.gmra.mxu0 %v254
  %v466 = vpop.f32.mrf.mxu0
  %v467 = vadd.f32 %v88, %v466
  %468 = vmatmul.f32.gmra.mxu0 %v257
  %v469 = vpop.f32.mrf.mxu0
  %v470 = vadd.f32 %v88, %v469
  %471 = vmatmul.f32.gmra.mxu0 %v260
  %v472 = vpop.f32.mrf.mxu0
  %v473 = vadd.f32 %v88, %v472
  %474 = vmatmul.f32.gmra.mxu0 %v263
  %v475 = vpop.f32.mrf.mxu0
  %v476 = vadd.f32 %v88, %v475
  %477 = vmatmul.f32.gmra.mxu0 %v266
  %v478 = vpop.f32.mrf.mxu0
  %v479 = vadd.f32 %v88, %v478
  %480 = vmatmul.f32.gmra.mxu0 %v269
  %v481 = vpop.f32.mrf.mxu0
  %v482 = vadd.f32 %v88, %v481
  %483 = vmatmul.f32.gmra.mxu0 %v272
  %v484 = vpop.f32.mrf.mxu0
  %v485 = vadd.f32 %v88, %v484
  %486 = vmatmul.f32.gmra.mxu0 %v275
  %v487 = vpop.f32.mrf.mxu0
  %v488 = vadd.f32 %v88, %v487
  %489 = vmatmul.f32.gmra.mxu0 %v278
  %v490 = vpop.f32.mrf.mxu0
  %v491 = vadd.f32 %v88, %v490
  %492 = vmatmul.f32.gmra.mxu0 %v281
  %v493 = vpop.f32.mrf.mxu0
  %v494 = vadd.f32 %v88, %v493
  %495 = vdwg.mxu0
  %vm496 = vcmask 113664
  %497 = vst.msk [vmem:[%s3] sm:$0xff] %vm496, %v305
  %498 = vst.msk [vmem:[%s3 + $0x8] sm:$0xff] %vm496, %v308
  %499 = vst.msk [vmem:[%s3 + $0x10] sm:$0xff] %vm496, %v311
  %500 = vst.msk [vmem:[%s3 + $0x18] sm:$0xff] %vm496, %v314
  %501 = vst.msk [vmem:[%s3 + $0x20] sm:$0xff] %vm496, %v317
  %502 = vst.msk [vmem:[%s3 + $0x28] sm:$0xff] %vm496, %v320
  %503 = vst.msk [vmem:[%s3 + $0x30] sm:$0xff] %vm496, %v323
  %504 = vst.msk [vmem:[%s3 + $0x38] sm:$0xff] %vm496, %v326
  %505 = vst.msk [vmem:[%s3 + $0x40] sm:$0xff] %vm496, %v329
  %506 = vst.msk [vmem:[%s3 + $0x48] sm:$0xff] %vm496, %v332
  %507 = vst.msk [vmem:[%s3 + $0x50] sm:$0xff] %vm496, %v335
  %508 = vst.msk [vmem:[%s3 + $0x58] sm:$0xff] %vm496, %v338
  %509 = vst.msk [vmem:[%s3 + $0x60] sm:$0xff] %vm496, %v341
  %510 = vst.msk [vmem:[%s3 + $0x68] sm:$0xff] %vm496, %v344
  %511 = vst.msk [vmem:[%s3 + $0x70] sm:$0xff] %vm496, %v347
  %512 = vst.msk [vmem:[%s3 + $0x78] sm:$0xff] %vm496, %v350
  %513 = vst.msk [vmem:[%s3 + $0x80] sm:$0xff] %vm496, %v353
  %514 = vst.msk [vmem:[%s3 + $0x88] sm:$0xff] %vm496, %v356
  %515 = vst.msk [vmem:[%s3 + $0x90] sm:$0xff] %vm496, %v359
  %516 = vst.msk [vmem:[%s3 + $0x98] sm:$0xff] %vm496, %v362
  %517 = vst.msk [vmem:[%s3 + $0xa0] sm:$0xff] %vm496, %v365
  %518 = vst.msk [vmem:[%s3 + $0xa8] sm:$0xff] %vm496, %v368
  %519 = vst.msk [vmem:[%s3 + $0xb0] sm:$0xff] %vm496, %v371
  %520 = vst.msk [vmem:[%s3 + $0xb8] sm:$0xff] %vm496, %v374
  %521 = vst.msk [vmem:[%s3 + $0xc0] sm:$0xff] %vm496, %v377
  %522 = vst.msk [vmem:[%s3 + $0xc8] sm:$0xff] %vm496, %v380
  %523 = vst.msk [vmem:[%s3 + $0xd0] sm:$0xff] %vm496, %v383
  %524 = vst.msk [vmem:[%s3 + $0xd8] sm:$0xff] %vm496, %v386
  %525 = vst.msk [vmem:[%s3 + $0xe0] sm:$0xff] %vm496, %v389
  %526 = vst.msk [vmem:[%s3 + $0xe8] sm:$0xff] %vm496, %v392
  %527 = vst.msk [vmem:[%s3 + $0xf0] sm:$0xff] %vm496, %v395
  %528 = vst.msk [vmem:[%s3 + $0xf8] sm:$0xff] %vm496, %v398
  %529 = vst.msk [vmem:[%s3 + $0x100] sm:$0xff] %vm496, %v401
  %530 = vst.msk [vmem:[%s3 + $0x108] sm:$0xff] %vm496, %v404
  %531 = vst.msk [vmem:[%s3 + $0x110] sm:$0xff] %vm496, %v407
  %532 = vst.msk [vmem:[%s3 + $0x118] sm:$0xff] %vm496, %v410
  %533 = vst.msk [vmem:[%s3 + $0x120] sm:$0xff] %vm496, %v413
  %534 = vst.msk [vmem:[%s3 + $0x128] sm:$0xff] %vm496, %v416
  %535 = vst.msk [vmem:[%s3 + $0x130] sm:$0xff] %vm496, %v419
  %536 = vst.msk [vmem:[%s3 + $0x138] sm:$0xff] %vm496, %v422
  %537 = vst.msk [vmem:[%s3 + $0x140] sm:$0xff] %vm496, %v425
  %538 = vst.msk [vmem:[%s3 + $0x148] sm:$0xff] %vm496, %v428
  %539 = vst.msk [vmem:[%s3 + $0x150] sm:$0xff] %vm496, %v431
  %540 = vst.msk [vmem:[%s3 + $0x158] sm:$0xff] %vm496, %v434
  %541 = vst.msk [vmem:[%s3 + $0x160] sm:$0xff] %vm496, %v437
  %542 = vst.msk [vmem:[%s3 + $0x168] sm:$0xff] %vm496, %v440
  %543 = vst.msk [vmem:[%s3 + $0x170] sm:$0xff] %vm496, %v443
  %544 = vst.msk [vmem:[%s3 + $0x178] sm:$0xff] %vm496, %v446
  %545 = vst.msk [vmem:[%s3 + $0x180] sm:$0xff] %vm496, %v449
  %546 = vst.msk [vmem:[%s3 + $0x188] sm:$0xff] %vm496, %v452
  %547 = vst.msk [vmem:[%s3 + $0x190] sm:$0xff] %vm496, %v455
  %548 = vst.msk [vmem:[%s3 + $0x198] sm:$0xff] %vm496, %v458
  %549 = vst.msk [vmem:[%s3 + $0x1a0] sm:$0xff] %vm496, %v461
  %550 = vst.msk [vmem:[%s3 + $0x1a8] sm:$0xff] %vm496, %v464
  %551 = vst.msk [vmem:[%s3 + $0x1b0] sm:$0xff] %vm496, %v467
  %552 = vst.msk [vmem:[%s3 + $0x1b8] sm:$0xff] %vm496, %v470
  %553 = vst.msk [vmem:[%s3 + $0x1c0] sm:$0xff] %vm496, %v473
  %554 = vst.msk [vmem:[%s3 + $0x1c8] sm:$0xff] %vm496, %v476
  %555 = vst.msk [vmem:[%s3 + $0x1d0] sm:$0xff] %vm496, %v479
  %556 = vst.msk [vmem:[%s3 + $0x1d8] sm:$0xff] %vm496, %v482
  %557 = vst.msk [vmem:[%s3 + $0x1e0] sm:$0xff] %vm496, %v485
  %558 = vst.msk [vmem:[%s3 + $0x1e8] sm:$0xff] %vm496, %v488
  %559 = vst.msk [vmem:[%s3 + $0x1f0] sm:$0xff] %vm496, %v491
  %560 = vst.msk [vmem:[%s3 + $0x1f8] sm:$0xff] %vm496, %v494
  %v561 = vsel %vm496, %v305, 0.0
  %v562 = vsel %vm496, %v308, 0.0
  %v563 = vadd.f32 %v561, %v562
  %v564 = vsel %vm496, %v311, 0.0
  %v565 = vadd.f32 %v563, %v564
  %v566 = vsel %vm496, %v314, 0.0
  %v567 = vadd.f32 %v565, %v566
  %v568 = vsel %vm496, %v317, 0.0
  %v569 = vadd.f32 %v567, %v568
  %v570 = vsel %vm496, %v320, 0.0
  %v571 = vadd.f32 %v569, %v570
  %v572 = vsel %vm496, %v323, 0.0
  %v573 = vadd.f32 %v571, %v572
  %v574 = vsel %vm496, %v326, 0.0
  %v575 = vadd.f32 %v573, %v574
  %v576 = vsel %vm496, %v329, 0.0
  %v577 = vadd.f32 %v575, %v576
  %v578 = vsel %vm496, %v332, 0.0
  %v579 = vadd.f32 %v577, %v578
  %v580 = vsel %vm496, %v335, 0.0
  %v581 = vadd.f32 %v579, %v580
  %v582 = vsel %vm496, %v338, 0.0
  %v583 = vadd.f32 %v581, %v582
  %v584 = vsel %vm496, %v341, 0.0
  %v585 = vadd.f32 %v583, %v584
  %v586 = vsel %vm496, %v344, 0.0
  %v587 = vadd.f32 %v585, %v586
  %v588 = vsel %vm496, %v347, 0.0
  %v589 = vadd.f32 %v587, %v588
  %v590 = vsel %vm496, %v350, 0.0
  %v591 = vadd.f32 %v589, %v590
  %v592 = vsel %vm496, %v353, 0.0
  %v593 = vadd.f32 %v591, %v592
  %v594 = vsel %vm496, %v356, 0.0
  %v595 = vadd.f32 %v593, %v594
  %v596 = vsel %vm496, %v359, 0.0
  %v597 = vadd.f32 %v595, %v596
  %v598 = vsel %vm496, %v362, 0.0
  %v599 = vadd.f32 %v597, %v598
  %v600 = vsel %vm496, %v365, 0.0
  %v601 = vadd.f32 %v599, %v600
  %v602 = vsel %vm496, %v368, 0.0
  %v603 = vadd.f32 %v601, %v602
  %v604 = vsel %vm496, %v371, 0.0
  %v605 = vadd.f32 %v603, %v604
  %v606 = vsel %vm496, %v374, 0.0
  %v607 = vadd.f32 %v605, %v606
  %v608 = vsel %vm496, %v377, 0.0
  %v609 = vadd.f32 %v607, %v608
  %v610 = vsel %vm496, %v380, 0.0
  %v611 = vadd.f32 %v609, %v610
  %v612 = vsel %vm496, %v383, 0.0
  %v613 = vadd.f32 %v611, %v612
  %v614 = vsel %vm496, %v386, 0.0
  %v615 = vadd.f32 %v613, %v614
  %v616 = vsel %vm496, %v389, 0.0
  %v617 = vadd.f32 %v615, %v616
  %v618 = vsel %vm496, %v392, 0.0
  %v619 = vadd.f32 %v617, %v618
  %v620 = vsel %vm496, %v395, 0.0
  %v621 = vadd.f32 %v619, %v620
  %v622 = vsel %vm496, %v398, 0.0
  %v623 = vadd.f32 %v621, %v622
  %v624 = vsel %vm496, %v401, 0.0
  %v625 = vadd.f32 %v623, %v624
  %v626 = vsel %vm496, %v404, 0.0
  %v627 = vadd.f32 %v625, %v626
  %v628 = vsel %vm496, %v407, 0.0
  %v629 = vadd.f32 %v627, %v628
  %v630 = vsel %vm496, %v410, 0.0
  %v631 = vadd.f32 %v629, %v630
  %v632 = vsel %vm496, %v413, 0.0
  %v633 = vadd.f32 %v631, %v632
  %v634 = vsel %vm496, %v416, 0.0
  %v635 = vadd.f32 %v633, %v634
  %v636 = vsel %vm496, %v419, 0.0
  %v637 = vadd.f32 %v635, %v636
  %v638 = vsel %vm496, %v422, 0.0
  %v639 = vadd.f32 %v637, %v638
  %v640 = vsel %vm496, %v425, 0.0
  %v641 = vadd.f32 %v639, %v640
  %v642 = vsel %vm496, %v428, 0.0
  %v643 = vadd.f32 %v641, %v642
  %v644 = vsel %vm496, %v431, 0.0
  %v645 = vadd.f32 %v643, %v644
  %v646 = vsel %vm496, %v434, 0.0
  %v647 = vadd.f32 %v645, %v646
  %v648 = vsel %vm496, %v437, 0.0
  %v649 = vadd.f32 %v647, %v648
  %v650 = vsel %vm496, %v440, 0.0
  %v651 = vadd.f32 %v649, %v650
  %v652 = vsel %vm496, %v443, 0.0
  %v653 = vadd.f32 %v651, %v652
  %v654 = vsel %vm496, %v446, 0.0
  %v655 = vadd.f32 %v653, %v654
  %v656 = vsel %vm496, %v449, 0.0
  %v657 = vadd.f32 %v655, %v656
  %v658 = vsel %vm496, %v452, 0.0
  %v659 = vadd.f32 %v657, %v658
  %v660 = vsel %vm496, %v455, 0.0
  %v661 = vadd.f32 %v659, %v660
  %v662 = vsel %vm496, %v458, 0.0
  %v663 = vadd.f32 %v661, %v662
  %v664 = vsel %vm496, %v461, 0.0
  %v665 = vadd.f32 %v663, %v664
  %v666 = vsel %vm496, %v464, 0.0
  %v667 = vadd.f32 %v665, %v666
  %v668 = vsel %vm496, %v467, 0.0
  %v669 = vadd.f32 %v667, %v668
  %v670 = vsel %vm496, %v470, 0.0
  %v671 = vadd.f32 %v669, %v670
  %v672 = vsel %vm496, %v473, 0.0
  %v673 = vadd.f32 %v671, %v672
  %v674 = vsel %vm496, %v476, 0.0
  %v675 = vadd.f32 %v673, %v674
  %v676 = vsel %vm496, %v479, 0.0
  %v677 = vadd.f32 %v675, %v676
  %v678 = vsel %vm496, %v482, 0.0
  %v679 = vadd.f32 %v677, %v678
  %v680 = vsel %vm496, %v485, 0.0
  %v681 = vadd.f32 %v679, %v680
  %v682 = vsel %vm496, %v488, 0.0
  %v683 = vadd.f32 %v681, %v682
  %v684 = vsel %vm496, %v491, 0.0
  %v685 = vadd.f32 %v683, %v684
  %v686 = vsel %vm496, %v494, 0.0
  %v687 = vadd.f32 %v685, %v686
  %v688 = vrot.slane %v687, 4
  %v689 = vadd.f32 %v687, %v688
  %v690 = vrot.slane %v689, 2
  %v691 = vadd.f32 %v689, %v690
  %v692 = vrot.slane %v691, 1
  %v693 = vadd.f32 %v691, %v692
  %vm694 = vcmask 106496
  %695 = vst.msk [vmem:[%s4] sm:$0x1] %vm694, %v693
  %v696 = vmul.f32 %v305, %v305
  %v697 = vmul.f32 %v308, %v308
  %v698 = vmul.f32 %v311, %v311
  %v699 = vmul.f32 %v314, %v314
  %v700 = vmul.f32 %v317, %v317
  %v701 = vmul.f32 %v320, %v320
  %v702 = vmul.f32 %v323, %v323
  %v703 = vmul.f32 %v326, %v326
  %v704 = vmul.f32 %v329, %v329
  %v705 = vmul.f32 %v332, %v332
  %v706 = vmul.f32 %v335, %v335
  %v707 = vmul.f32 %v338, %v338
  %v708 = vmul.f32 %v341, %v341
  %v709 = vmul.f32 %v344, %v344
  %v710 = vmul.f32 %v347, %v347
  %v711 = vmul.f32 %v350, %v350
  %v712 = vmul.f32 %v353, %v353
  %v713 = vmul.f32 %v356, %v356
  %v714 = vmul.f32 %v359, %v359
  %v715 = vmul.f32 %v362, %v362
  %v716 = vmul.f32 %v365, %v365
  %v717 = vmul.f32 %v368, %v368
  %v718 = vmul.f32 %v371, %v371
  %v719 = vmul.f32 %v374, %v374
  %v720 = vmul.f32 %v377, %v377
  %v721 = vmul.f32 %v380, %v380
  %v722 = vmul.f32 %v383, %v383
  %v723 = vmul.f32 %v386, %v386
  %v724 = vmul.f32 %v389, %v389
  %v725 = vmul.f32 %v392, %v392
  %v726 = vmul.f32 %v395, %v395
  %v727 = vmul.f32 %v398, %v398
  %v728 = vmul.f32 %v401, %v401
  %v729 = vmul.f32 %v404, %v404
  %v730 = vmul.f32 %v407, %v407
  %v731 = vmul.f32 %v410, %v410
  %v732 = vmul.f32 %v413, %v413
  %v733 = vmul.f32 %v416, %v416
  %v734 = vmul.f32 %v419, %v419
  %v735 = vmul.f32 %v422, %v422
  %v736 = vmul.f32 %v425, %v425
  %v737 = vmul.f32 %v428, %v428
  %v738 = vmul.f32 %v431, %v431
  %v739 = vmul.f32 %v434, %v434
  %v740 = vmul.f32 %v437, %v437
  %v741 = vmul.f32 %v440, %v440
  %v742 = vmul.f32 %v443, %v443
  %v743 = vmul.f32 %v446, %v446
  %v744 = vmul.f32 %v449, %v449
  %v745 = vmul.f32 %v452, %v452
  %v746 = vmul.f32 %v455, %v455
  %v747 = vmul.f32 %v458, %v458
  %v748 = vmul.f32 %v461, %v461
  %v749 = vmul.f32 %v464, %v464
  %v750 = vmul.f32 %v467, %v467
  %v751 = vmul.f32 %v470, %v470
  %v752 = vmul.f32 %v473, %v473
  %v753 = vmul.f32 %v476, %v476
  %v754 = vmul.f32 %v479, %v479
  %v755 = vmul.f32 %v482, %v482
  %v756 = vmul.f32 %v485, %v485
  %v757 = vmul.f32 %v488, %v488
  %v758 = vmul.f32 %v491, %v491
  %v759 = vmul.f32 %v494, %v494
  %v760 = vsel %vm496, %v696, 0.0
  %v761 = vsel %vm496, %v697, 0.0
  %v762 = vadd.f32 %v760, %v761
  %v763 = vsel %vm496, %v698, 0.0
  %v764 = vadd.f32 %v762, %v763
  %v765 = vsel %vm496, %v699, 0.0
  %v766 = vadd.f32 %v764, %v765
  %v767 = vsel %vm496, %v700, 0.0
  %v768 = vadd.f32 %v766, %v767
  %v769 = vsel %vm496, %v701, 0.0
  %v770 = vadd.f32 %v768, %v769
  %v771 = vsel %vm496, %v702, 0.0
  %v772 = vadd.f32 %v770, %v771
  %v773 = vsel %vm496, %v703, 0.0
  %v774 = vadd.f32 %v772, %v773
  %v775 = vsel %vm496, %v704, 0.0
  %v776 = vadd.f32 %v774, %v775
  %v777 = vsel %vm496, %v705, 0.0
  %v778 = vadd.f32 %v776, %v777
  %v779 = vsel %vm496, %v706, 0.0
  %v780 = vadd.f32 %v778, %v779
  %v781 = vsel %vm496, %v707, 0.0
  %v782 = vadd.f32 %v780, %v781
  %v783 = vsel %vm496, %v708, 0.0
  %v784 = vadd.f32 %v782, %v783
  %v785 = vsel %vm496, %v709, 0.0
  %v786 = vadd.f32 %v784, %v785
  %v787 = vsel %vm496, %v710, 0.0
  %v788 = vadd.f32 %v786, %v787
  %v789 = vsel %vm496, %v711, 0.0
  %v790 = vadd.f32 %v788, %v789
  %v791 = vsel %vm496, %v712, 0.0
  %v792 = vadd.f32 %v790, %v791
  %v793 = vsel %vm496, %v713, 0.0
  %v794 = vadd.f32 %v792, %v793
  %v795 = vsel %vm496, %v714, 0.0
  %v796 = vadd.f32 %v794, %v795
  %v797 = vsel %vm496, %v715, 0.0
  %v798 = vadd.f32 %v796, %v797
  %v799 = vsel %vm496, %v716, 0.0
  %v800 = vadd.f32 %v798, %v799
  %v801 = vsel %vm496, %v717, 0.0
  %v802 = vadd.f32 %v800, %v801
  %v803 = vsel %vm496, %v718, 0.0
  %v804 = vadd.f32 %v802, %v803
  %v805 = vsel %vm496, %v719, 0.0
  %v806 = vadd.f32 %v804, %v805
  %v807 = vsel %vm496, %v720, 0.0
  %v808 = vadd.f32 %v806, %v807
  %v809 = vsel %vm496, %v721, 0.0
  %v810 = vadd.f32 %v808, %v809
  %v811 = vsel %vm496, %v722, 0.0
  %v812 = vadd.f32 %v810, %v811
  %v813 = vsel %vm496, %v723, 0.0
  %v814 = vadd.f32 %v812, %v813
  %v815 = vsel %vm496, %v724, 0.0
  %v816 = vadd.f32 %v814, %v815
  %v817 = vsel %vm496, %v725, 0.0
  %v818 = vadd.f32 %v816, %v817
  %v819 = vsel %vm496, %v726, 0.0
  %v820 = vadd.f32 %v818, %v819
  %v821 = vsel %vm496, %v727, 0.0
  %v822 = vadd.f32 %v820, %v821
  %v823 = vsel %vm496, %v728, 0.0
  %v824 = vadd.f32 %v822, %v823
  %v825 = vsel %vm496, %v729, 0.0
  %v826 = vadd.f32 %v824, %v825
  %v827 = vsel %vm496, %v730, 0.0
  %v828 = vadd.f32 %v826, %v827
  %v829 = vsel %vm496, %v731, 0.0
  %v830 = vadd.f32 %v828, %v829
  %v831 = vsel %vm496, %v732, 0.0
  %v832 = vadd.f32 %v830, %v831
  %v833 = vsel %vm496, %v733, 0.0
  %v834 = vadd.f32 %v832, %v833
  %v835 = vsel %vm496, %v734, 0.0
  %v836 = vadd.f32 %v834, %v835
  %v837 = vsel %vm496, %v735, 0.0
  %v838 = vadd.f32 %v836, %v837
  %v839 = vsel %vm496, %v736, 0.0
  %v840 = vadd.f32 %v838, %v839
  %v841 = vsel %vm496, %v737, 0.0
  %v842 = vadd.f32 %v840, %v841
  %v843 = vsel %vm496, %v738, 0.0
  %v844 = vadd.f32 %v842, %v843
  %v845 = vsel %vm496, %v739, 0.0
  %v846 = vadd.f32 %v844, %v845
  %v847 = vsel %vm496, %v740, 0.0
  %v848 = vadd.f32 %v846, %v847
  %v849 = vsel %vm496, %v741, 0.0
  %v850 = vadd.f32 %v848, %v849
  %v851 = vsel %vm496, %v742, 0.0
  %v852 = vadd.f32 %v850, %v851
  %v853 = vsel %vm496, %v743, 0.0
  %v854 = vadd.f32 %v852, %v853
  %v855 = vsel %vm496, %v744, 0.0
  %v856 = vadd.f32 %v854, %v855
  %v857 = vsel %vm496, %v745, 0.0
  %v858 = vadd.f32 %v856, %v857
  %v859 = vsel %vm496, %v746, 0.0
  %v860 = vadd.f32 %v858, %v859
  %v861 = vsel %vm496, %v747, 0.0
  %v862 = vadd.f32 %v860, %v861
  %v863 = vsel %vm496, %v748, 0.0
  %v864 = vadd.f32 %v862, %v863
  %v865 = vsel %vm496, %v749, 0.0
  %v866 = vadd.f32 %v864, %v865
  %v867 = vsel %vm496, %v750, 0.0
  %v868 = vadd.f32 %v866, %v867
  %v869 = vsel %vm496, %v751, 0.0
  %v870 = vadd.f32 %v868, %v869
  %v871 = vsel %vm496, %v752, 0.0
  %v872 = vadd.f32 %v870, %v871
  %v873 = vsel %vm496, %v753, 0.0
  %v874 = vadd.f32 %v872, %v873
  %v875 = vsel %vm496, %v754, 0.0
  %v876 = vadd.f32 %v874, %v875
  %v877 = vsel %vm496, %v755, 0.0
  %v878 = vadd.f32 %v876, %v877
  %v879 = vsel %vm496, %v756, 0.0
  %v880 = vadd.f32 %v878, %v879
  %v881 = vsel %vm496, %v757, 0.0
  %v882 = vadd.f32 %v880, %v881
  %v883 = vsel %vm496, %v758, 0.0
  %v884 = vadd.f32 %v882, %v883
  %v885 = vsel %vm496, %v759, 0.0
  %v886 = vadd.f32 %v884, %v885
  %v887 = vrot.slane %v886, 4
  %v888 = vadd.f32 %v886, %v887
  %v889 = vrot.slane %v888, 2
  %v890 = vadd.f32 %v888, %v889
  %v891 = vrot.slane %v890, 1
  %v892 = vadd.f32 %v890, %v891
  %893 = vst.msk [vmem:[%s5] sm:$0x1] %vm694, %v892
  // Predicated region
  $region14: #{r2plus1d_block.2} parent=0 // pred_check
    _
  $region15: #{r2plus1d_block.2} parent=0 // pred_check_branch
    %895 = sbr.rel (0) target = $region17
  $region16: #{r2plus1d_block.2} parent=0 // pred_region
    _
  $region17: #{r2plus1d_block.2} parent=0 // pred_fallthru
    _
  // Predicated region
  $region18: #{r2plus1d_block.2} parent=0 // pred_check
    _
  $region19: #{r2plus1d_block.2} parent=0 // pred_check_branch
    %897 = sbr.rel (0) target = $region21
  $region20: #{r2plus1d_block.2} parent=0 // pred_region
    _
  $region21: #{r2plus1d_block.2} parent=0 // pred_fallthru
    _
  // Predicated region
  $region22: #{r2plus1d_block.2} parent=0 // pred_check
    _
  $region23: #{r2plus1d_block.2} parent=0 // pred_check_branch
    %899 = sbr.rel (0) target = $region25
  $region24: #{r2plus1d_block.2} parent=0 // pred_region
    _
  $region25: #{r2plus1d_block.2} parent=0 // pred_fallthru
    _
  // Predicated region
  $region26: #{r2plus1d_block.2} parent=0 // pred_check
    _
  $region27: #{r2plus1d_block.2} parent=0 // pred_check_branch
    %901 = sbr.rel (0) target = $region29
  $region28: #{r2plus1d_block.2} parent=0 // pred_region
    _
  $region29: #{r2plus1d_block.2} parent=0 // pred_fallthru
    _
  // Predicated region
  $region30: #{r2plus1d_block.2} parent=0 // pred_check
    _
  $region31: #{r2plus1d_block.2} parent=0 // pred_check_branch
    %903 = sbr.rel (0) target = $region33
  $region32: #{r2plus1d_block.2} parent=0 // pred_region
    _
  $region33: #{r2plus1d_block.2} parent=0 // pred_fallthru
    _
  // Predicated region
  $region34: #{r2plus1d_block.2} parent=0 // pred_check
    _
  $region35: #{r2plus1d_block.2} parent=0 // pred_check_branch
    %905 = sbr.rel (0) target = $region37
  $region36: #{r2plus1d_block.2} parent=0 // pred_region
    _
  $region37: #{r2plus1d_block.2} parent=0 // pred_fallthru
    _

// kernel: r2plus1d_block.3
$region0: #{r2plus1d_block.3}
  #allocation0 [shape = 'u32[]', space=smem, size = 0x4, offset = 0x4, fixed_abs, tag = 'smem constant byte address 0x4 - core index']
  #allocation1 [shape = 'u32[72,128]{1,0:T(1,128)}', space=vmem, size = 0x9000, scoped, tag = 'internal scratch']
  %s0 = inlined_call_operand.vmem [shape: f32[2,4,64,14], index: 0, kind: input, shape index: {}]
  %s1 = inlined_call_operand.vmem [shape: f32[1,14], index: 1, kind: input, shape index: {}]
  %s2 = inlined_call_operand.vmem [shape: f32[1,14], index: 2, kind: input, shape index: {}]
  %s3 = inlined_call_operand.vmem [shape: f32[3,14,8], index: 3, kind: input, shape index: {}]
  %s4 = inlined_call_operand.vmem [shape: f32[1,8], index: 4, kind: input, shape index: {}]
  %s5 = inlined_call_operand.vmem [shape: f32[2,4,64,8], index: 5, kind: output, shape index: {}]
  %s6 = sld [smem:[#allocation0]]
  $region53: #{r2plus1d_block.3} parent=0
    _
  %s8 = ssub.s32 1, %s6
  %s9 = scalar_select 0, %s8, %s6
  loop: start=0, step=1, limit=4
  $region2: #{r2plus1d_block.3} parent=0 // loop_pre_header
    _
  $region3: #{r2plus1d_block.3} parent=0 // loop_header
    %s11 = sphi 0, %s15
    %p12 = scmp.ge.s32.totalorder %s11, 4
    %s18 = sphi 0, %s30
    %s19 = sphi 0, %s26
    %s20 = sphi 0, %s18
    %s21 = sphi 0, %s19
    %s22 = sphi 0, %s20
    %s23 = sphi 0, %s21
    %s35 = sphi 0, %s37
    %s38 = sphi 0, %s35
    %s39 = sphi 0, %s38
    %s55 = sphi 0, %s39
    %s59 = sphi 0, %s59
    %s61 = sphi 0, %s59
    %s62 = sphi 0, %s61
    %s76 = sphi 0, %s62
    %s80 = sphi 0, %s80
    %s82 = sphi 0, %s80
    %s83 = sphi 0, %s82
    %s97 = sphi 0, %s83
    %s101 = sphi 0, %s101
    %s103 = sphi 0, %s101
    %s104 = sphi 0, %s103
    %s118 = sphi 0, %s104
    %s122 = sphi 0, %s122
    %s124 = sphi 0, %s122
    %s125 = sphi 0, %s124
    %s139 = sphi 0, %s125
    %s147 = sphi 0, %s149
    %s150 = sphi 0, %s147
    %s151 = sphi 0, %s150
    %s167 = sphi 0, %s151
  $region4: #{r2plus1d_block.3} parent=0 // loop_header_branch
    %14 = sbr.rel (%p12) target = $region8
  $region5: #{r2plus1d_block.3} parent=0 // loop_body
    %s16 = ssub.s32 %s11, 1
    %s17 = ssub.s32 %s11, 2
    %s24 = sadd.s32 1, %s19
    %p25 = scmp.ge.s32.totalorder %s24, 1
    %s26 = scalar_select %p25, 0, %s24
    %s27 = sadd.s32 1, %s18
    %s28 = scalar_select %p25, %s27, %s18
    %p29 = scmp.ge.s32.totalorder %s28, 2
    %s30 = scalar_select %p29, 0, %s28
    %s31 = ssub.s32 %s18, %s30
    %s32 = ssub.s32 %s19, %s26
    %s33 = sor.u32 %s31, %s32
    %p34 = scmp.eq.s32.totalorder %s33, 0
    %s36 = sadd.s32 %s35, 1
    %s37 = scalar_select %p34, %s35, %s36
    %p40 = pneg %p34
    %p41 = scmp.eq.s32.totalorder %s11, 1
    %p42 = por %p40, %p41
    %p43 = scmp.ne.s32.totalorder %s35, %s38
    %p44 = scmp.eq.s32.totalorder %s11, 0
    %p45 = por %p43, %p44
    %p46 = scmp.ne.s32.totalorder %s35, %s38
    %p47 = scmp.eq.s32.totalorder %s16, 1
    %p48 = por %p46, %p47
    %p49 = scmp.ne.s32.totalorder %s38, %s39
    %p50 = scmp.eq.s32.totalorder %s16, 0
    %p51 = por %p49, %p50
    %p52 = scmp.ne.s32.totalorder %s38, %s39
    %p53 = scmp.eq.s32.totalorder %s17, 1
    %p54 = por %p52, %p53
    %p56 = scmp.ne.s32.totalorder %s39, %s55
    %p57 = scmp.eq.s32.totalorder %s17, 0
    %p58 = por %p56, %p57
    %s60 = sadd.s32 %s59, 1
    %p63 = scmp.eq.s32.totalorder %s11, 1
    %p64 = scmp.ne.s32.totalorder %s59, %s61
    %p65 = scmp.eq.s32.totalorder %s11, 0
    %p66 = por %p64, %p65
    %p67 = scmp.ne.s32.totalorder %s59, %s61
    %p68 = scmp.eq.s32.totalorder %s16, 1
    %p69 = por %p67, %p68
    %p70 = scmp.ne.s32.totalorder %s61, %s62
    %p71 = scmp.eq.s32.totalorder %s16, 0
    %p72 = por %p70, %p71
    %p73 = scmp.ne.s32.totalorder %s61, %s62
    %p74 = scmp.eq.s32.totalorder %s17, 1
    %p75 = por %p73, %p74
    %p77 = scmp.ne.s32.totalorder %s62, %s76
    %p78 = scmp.eq.s32.totalorder %s17, 0
    %p79 = por %p77, %p78
    %s81 = sadd.s32 %s80, 1
    %p84 = scmp.eq.s32.totalorder %s11, 1
    %p85 = scmp.ne.s32.totalorder %s80, %s82
    %p86 = scmp.eq.s32.totalorder %s11, 0
    %p87 = por %p85, %p86
    %p88 = scmp.ne.s32.totalorder %s80, %s82
    %p89 = scmp.eq.s32.totalorder %s16, 1
    %p90 = por %p88, %p89
    %p91 = scmp.ne.s32.totalorder %s82, %s83
    %p92 = scmp.eq.s32.totalorder %s16, 0
    %p93 = por %p91, %p92
    %p94 = scmp.ne.s32.totalorder %s82, %s83
    %p95 = scmp.eq.s32.totalorder %s17, 1
    %p96 = por %p94, %p95
    %p98 = scmp.ne.s32.totalorder %s83, %s97
    %p99 = scmp.eq.s32.totalorder %s17, 0
    %p100 = por %p98, %p99
    %s102 = sadd.s32 %s101, 1
    %p105 = scmp.eq.s32.totalorder %s11, 1
    %p106 = scmp.ne.s32.totalorder %s101, %s103
    %p107 = scmp.eq.s32.totalorder %s11, 0
    %p108 = por %p106, %p107
    %p109 = scmp.ne.s32.totalorder %s101, %s103
    %p110 = scmp.eq.s32.totalorder %s16, 1
    %p111 = por %p109, %p110
    %p112 = scmp.ne.s32.totalorder %s103, %s104
    %p113 = scmp.eq.s32.totalorder %s16, 0
    %p114 = por %p112, %p113
    %p115 = scmp.ne.s32.totalorder %s103, %s104
    %p116 = scmp.eq.s32.totalorder %s17, 1
    %p117 = por %p115, %p116
    %p119 = scmp.ne.s32.totalorder %s104, %s118
    %p120 = scmp.eq.s32.totalorder %s17, 0
    %p121 = por %p119, %p120
    %s123 = sadd.s32 %s122, 1
    %p126 = scmp.eq.s32.totalorder %s11, 1
    %p127 = scmp.ne.s32.totalorder %s122, %s124
    %p128 = scmp.eq.s32.totalorder %s11, 0
    %p129 = por %p127, %p128
    %p130 = scmp.ne.s32.totalorder %s122, %s124
    %p131 = scmp.eq.s32.totalorder %s16, 1
    %p132 = por %p130, %p131
    %p133 = scmp.ne.s32.totalorder %s124, %s125
    %p134 = scmp.eq.s32.totalorder %s16, 0
    %p135 = por %p133, %p134
    %p136 = scmp.ne.s32.totalorder %s124, %s125
    %p137 = scmp.eq.s32.totalorder %s17, 1
    %p138 = por %p136, %p137
    %p140 = scmp.ne.s32.totalorder %s125, %s139
    %p141 = scmp.eq.s32.totalorder %s17, 0
    %p142 = por %p140, %p141
    %s143 = ssub.s32 %s18, %s30
    %s144 = ssub.s32 %s19, %s26
    %s145 = sor.u32 %s143, %s144
    %p146 = scmp.eq.s32.totalorder %s145, 0
    %s148 = sadd.s32 %s147, 1
    %s149 = scalar_select %p146, %s147, %s148
    %p152 = pneg %p146
    %p153 = scmp.eq.s32.totalorder %s11, 1
    %p154 = por %p152, %p153
    %p155 = scmp.ne.s32.totalorder %s147, %s150
    %p156 = scmp.eq.s32.totalorder %s11, 0
    %p157 = por %p155, %p156
    %p158 = scmp.ne.s32.totalorder %s147, %s150
    %p159 = scmp.eq.s32.totalorder %s16, 1
    %p160 = por %p158, %p159
    %p161 = scmp.ne.s32.totalorder %s150, %s151
    %p162 = scmp.eq.s32.totalorder %s16, 0
    %p163 = por %p161, %p162
    %p164 = scmp.ne.s32.totalorder %s150, %s151
    %p165 = scmp.eq.s32.totalorder %s17, 1
    %p166 = por %p164, %p165
    %p168 = scmp.ne.s32.totalorder %s151, %s167
    %p169 = scmp.eq.s32.totalorder %s17, 0
    %p170 = por %p168, %p169
    %p171 = scmp.le.s32.totalorder 1, %s11
    %p172 = scmp.lt.s32.totalorder %s11, 3
    %p173 = pnand %p171, %p172
    %p174 = pneg %p173
    // Predicated region
    $region9: #{r2plus1d_block.3} parent=5 // pred_check
      _
    $region10: #{r2plus1d_block.3} parent=5 // pred_check_branch
      %176 = sbr.rel (%p173) target = $region12
    $region11: #{r2plus1d_block.3} parent=5 // pred_region
      %s177 = ssub.s32 %s11, 1
      // Predicated region
      $region13: #{r2plus1d_block.3} parent=11 // pred_check
        %p178 = pneg %p72
      $region14: #{r2plus1d_block.3} parent=11 // pred_check_branch
        %180 = sbr.rel (%p178) target = $region16
      $region15: #{r2plus1d_block.3} parent=11 // pred_region
        _
      $region16: #{r2plus1d_block.3} parent=11 // pred_fallthru
        _
      // Predicated region
      $region17: #{r2plus1d_block.3} parent=11 // pred_check
        %p181 = pneg %p93
      $region18: #{r2plus1d_block.3} parent=11 // pred_check_branch
        %183 = sbr.rel (%p181) target = $region20
      $region19: #{r2plus1d_block.3} parent=11 // pred_region
        _
      $region20: #{r2plus1d_block.3} parent=11 // pred_fallthru
        _
      // Predicated region
      $region21: #{r2plus1d_block.3} parent=11 // pred_check
        %p184 = pneg %p114
      $region22: #{r2plus1d_block.3} parent=11 // pred_check_branch
        %186 = sbr.rel (%p184) target = $region24
      $region23: #{r2plus1d_block.3} parent=11 // pred_region
        _
      $region24: #{r2plus1d_block.3} parent=11 // pred_fallthru
        _
      // Predicated region
      $region25: #{r2plus1d_block.3} parent=11 // pred_check
        %p187 = pneg %p135
      $region26: #{r2plus1d_block.3} parent=11 // pred_check_branch
        %189 = sbr.rel (%p187) target = $region28
      $region27: #{r2plus1d_block.3} parent=11 // pred_region
        _
      $region28: #{r2plus1d_block.3} parent=11 // pred_fallthru
        _
    $region12: #{r2plus1d_block.3} parent=5 // pred_fallthru
      _
    %p190 = scmp.lt.s32.totalorder %s11, 2
    // Predicated region
    $region29: #{r2plus1d_block.3} parent=5 // pred_check
      %p191 = pneg %p190
    $region30: #{r2plus1d_block.3} parent=5 // pred_check_branch
      %193 = sbr.rel (%p191) target = $region32
    $region31: #{r2plus1d_block.3} parent=5 // pred_region
      // Predicated region
      $region33: #{r2plus1d_block.3} parent=31 // pred_check
        %p194 = pneg %p45
      $region34: #{r2plus1d_block.3} parent=31 // pred_check_branch
        %196 = sbr.rel (%p194) target = $region36
      $region35: #{r2plus1d_block.3} parent=31 // pred_region
        %s197 = smul.u32 8, %s19
        %p198 = scmp.lt.s32.totalorder %s18, 1
        %s199 = scalar_select %p198, %s18, 1
        %p200 = scmp.lt.s32.totalorder %s197, 7
        %s201 = scalar_select %p200, %s197, 7
        %s202 = smul.addr %s199, 32
        %s203 = sadd.s32 %s201, %s202
        %s204 = smul.addr %s203, 8
        %s205 = scalar_lea.vmem %s0, %s204
        %s206 = smul.u32 8, %s19
      $region36: #{r2plus1d_block.3} parent=31 // pred_fallthru
        _
    $region32: #{r2plus1d_block.3} parent=5 // pred_fallthru
      _
    %p207 = scmp.le.s32.totalorder 1, %s11
    %p208 = scmp.lt.s32.totalorder %s11, 3
    %p209 = pnand %p207, %p208
    %p210 = pneg %p209
    // Predicated region
    $region37: #{r2plus1d_block.3} parent=5 // pred_check
      _
    $region38: #{r2plus1d_block.3} parent=5 // pred_check_branch
      %212 = sbr.rel (%p209) target = $region40
    $region39: #{r2plus1d_block.3} parent=5 // pred_region
      %s213 = ssub.s32 %s11, 1
      %s214 = smul.u32 8, %s21
      %p215 = scmp.lt.s32.totalorder %s20, 1
      %s216 = scalar_select %p215, %s20, 1
      %p217 = scmp.lt.s32.totalorder %s214, 7
      %s218 = scalar_select %p217, %s214, 7
      %s219 = smul.addr %s216, 32
      %s220 = sadd.s32 %s218, %s219
      %s221 = smul.addr %s220, 8
      %s222 = scalar_lea.vmem %s0, %s221
      %p223 = pneg %p51
      %p224 = pneg %p48
      %p225 = pneg %p72
      %p226 = pneg %p69
      %p227 = pneg %p93
      %p228 = pneg %p90
      %p229 = pneg %p114
      %p230 = pneg %p111
      %p231 = pneg %p135
      %p232 = pneg %p132
      %p233 = pneg %p163
      %p234 = pneg %p160
      %s235 = smul.u32 8, %s21
      %p236 = scmp.lt.s32.totalorder %s20, 1
      %s237 = scalar_select %p236, %s20, 1
      %p238 = scmp.lt.s32.totalorder %s235, 7
      %s239 = scalar_select %p238, %s235, 7
      %s240 = smul.addr %s237, 32
      %s241 = sadd.s32 %s239, %s240
      %s242 = smul.addr %s241, 8
      %s243 = scalar_lea.vmem %s5, %s242
      %s244 = smul.u32 8, %s21
      %p245 = scmp.lt.s32.totalorder %s20, 1
      %s246 = scalar_select %p245, %s20, 1
      %p247 = scmp.lt.s32.totalorder %s244, 7
      %s248 = scalar_select %p247, %s244, 7
      %s249 = smul.addr %s246, 32
      %s250 = sadd.s32 %s248, %s249
      %s251 = smul.addr %s250, 8
      %s252 = scalar_lea.vmem %s0, %s251
      %s253 = smul.u32 8, %s21
      %s254 = smul.u32 8, %s21
      %p255 = scmp.lt.s32.totalorder %s20, 1
      %s256 = scalar_select %p255, %s20, 1
      %p257 = scmp.lt.s32.totalorder %s254, 7
      %s258 = scalar_select %p257, %s254, 7
      %s259 = smul.addr %s256, 32
      %s260 = sadd.s32 %s258, %s259
      %s261 = smul.addr %s260, 8
      %s262 = scalar_lea.vmem %s5, %s261
      %s263 = smul.u32 8, %s21
      %v264 = vld [vmem:[%s1] sm:$0x1]
      %v265 = vld [vmem:[%s2] sm:$0x1]
      %v266 = vld [vmem:[%s4] sm:$0x1]
      %v267 = vld [vmem:[%s252] sm:$0xff]
      %v268 = vld [vmem:[%s252 + $0x8] sm:$0xff]
      %v269 = vld [vmem:[%s252 + $0x10] sm:$0xff]
      %v270 = vld [vmem:[%s252 + $0x18] sm:$0xff]
      %v271 = vld [vmem:[%s252 + $0x20] sm:$0xff]
      %v272 = vld [vmem:[%s252 + $0x28] sm:$0xff]
      %v273 = vld [vmem:[%s252 + $0x30] sm:$0xff]
      %v274 = vld [vmem:[%s252 + $0x38] sm:$0xff]
      %v276 = vperm.slane %v264, 0
      %v278 = vmul.f32 %v267, %v276
      %v279 = vmul.f32 %v268, %v276
      %v280 = vmul.f32 %v269, %v276
      %v281 = vmul.f32 %v270, %v276
      %v282 = vmul.f32 %v271, %v276
      %v283 = vmul.f32 %v272, %v276
      %v284 = vmul.f32 %v273, %v276
      %v285 = vmul.f32 %v274, %v276
      %v287 = vperm.slane %v265, 0
      %v289 = vadd.f32 %v278, %v287
      %v290 = vadd.f32 %v279, %v287
      %v291 = vadd.f32 %v280, %v287
      %v292 = vadd.f32 %v281, %v287
      %v293 = vadd.f32 %v282, %v287
      %v294 = vadd.f32 %v283, %v287
      %v295 = vadd.f32 %v284, %v287
      %v296 = vadd.f32 %v285, %v287
      %v297 = vmax.f32 %v289, 0.0
      %v298 = vmax.f32 %v290, 0.0
      %v299 = vmax.f32 %v291, 0.0
      %v300 = vmax.f32 %v292, 0.0
      %v301 = vmax.f32 %v293, 0.0
      %v302 = vmax.f32 %v294, 0.0
      %v303 = vmax.f32 %v295, 0.0
      %v304 = vmax.f32 %v296, 0.0
      %s305 = scalar_lea.vmem %s3, 16
      %v306 = vld [vmem:[%s305] sm:$0xff]
      %v307 = vld [vmem:[%s305 + $0x8] sm:$0x3f]
      %s308 = scalar_lea.vmem %s252, 64
      %v309 = vld [vmem:[%s308] sm:$0xff]
      %v310 = vld [vmem:[%s308 + $0x8] sm:$0xff]
      %v311 = vld [vmem:[%s308 + $0x10] sm:$0xff]
      %v312 = vld [vmem:[%s308 + $0x18] sm:$0xff]
      %v313 = vld [vmem:[%s308 + $0x20] sm:$0xff]
      %v314 = vld [vmem:[%s308 + $0x28] sm:$0xff]
      %v315 = vld [vmem:[%s308 + $0x30] sm:$0xff]
      %v316 = vld [vmem:[%s308 + $0x38] sm:$0xff]
      %v317 = vmul.f32 %v309, %v276
      %v318 = vmul.f32 %v310, %v276
      %v319 = vmul.f32 %v311, %v276
      %v320 = vmul.f32 %v312, %v276
      %v321 = vmul.f32 %v313, %v276
      %v322 = vmul.f32 %v314, %v276
      %v323 = vmul.f32 %v315, %v276
      %v324 = vmul.f32 %v316, %v276
      %v325 = vadd.f32 %v317, %v287
      %v326 = vadd.f32 %v318, %v287
      %v327 = vadd.f32 %v319, %v287
      %v328 = vadd.f32 %v320, %v287
      %v329 = vadd.f32 %v321, %v287
      %v330 = vadd.f32 %v322, %v287
      %v331 = vadd.f32 %v323, %v287
      %v332 = vadd.f32 %v324, %v287
      %v333 = vmax.f32 %v325, 0.0
      %v334 = vmax.f32 %v326, 0.0
      %v335 = vmax.f32 %v327, 0.0
      %v336 = vmax.f32 %v328, 0.0
      %v337 = vmax.f32 %v329, 0.0
      %v338 = vmax.f32 %v330, 0.0
      %v339 = vmax.f32 %v331, 0.0
      %v340 = vmax.f32 %v332, 0.0
      %s341 = scalar_lea.vmem %s3, 32
      %v342 = vld [vmem:[%s341] sm:$0xff]
      %v343 = vld [vmem:[%s341 + $0x8] sm:$0x3f]
      %vm344 = vcmask 113664
      %v346 = vsel %vm344, %v333, 0
      %v349 = vsel %vm344, %v334, 0
      %v352 = vsel %vm344, %v335, 0
      %v355 = vsel %vm344, %v336, 0
      %v358 = vsel %vm344, %v337, 0
      %v361 = vsel %vm344, %v338, 0
      %v364 = vsel %vm344, %v339, 0
      %v367 = vsel %vm344, %v340, 0
      %vm369 = vcmask 1045504
      %v371 = vsel %vm369, %v343, 0
      %373 = vmatpush.msra.mxu0 0.0
      %374 = vmatpush.msra.mxu0 0.0
      %375 = vmatpush.msra.mxu0 0.0
      %376 = vmatpush.msra.mxu0 0.0
      %377 = vmatpush.msra.mxu0 0.0
      %378 = vmatpush.msra.mxu0 0.0
      %379 = vmatpush.msra.mxu0 0.0
      %380 = vmatpush.msra.mxu0 0.0
      %381 = vmatpush.msra.mxu0 0.0
      %382 = vmatpush.msra.mxu0 0.0
      %383 = vmatpush.msra.mxu0 0.0
      %384 = vmatpush.msra.mxu0 0.0
      %385 = vmatpush.msra.mxu0 0.0
      %386 = vmatpush.msra.mxu0 0.0
      %387 = vmatpush.msra.mxu0 %v371
      %388 = vmatpush.msra.mxu0 %v342
      %389 = vmatmul.f32.gmra.mxu0 %v346
      %v390 = vpop.f32.mrf.mxu0
      %v391 = vadd.f32 0.0, %v390
      %392 = vmatmul.f32.gmra.mxu0 %v349
      %v393 = vpop.f32.mrf.mxu0
      %v394 = vadd.f32 0.0, %v393
      %395 = vmatmul.f32.gmra.mxu0 %v352
      %v396 = vpop.f32.mrf.mxu0
      %v397 = vadd.f32 0.0, %v396
      %398 = vmatmul.f32.gmra.mxu0 %v355
      %v399 = vpop.f32.mrf.mxu0
      %v400 = vadd.f32 0.0, %v399
      %401 = vmatmul.f32.gmra.mxu0 %v358
      %v402 = vpop.f32.mrf.mxu0
      %v403 = vadd.f32 0.0, %v402
      %404 = vmatmul.f32.gmra.mxu0 %v361
      %v405 = vpop.f32.mrf.mxu0
      %v406 = vadd.f32 0.0, %v405
      %407 = vmatmul.f32.gmra.mxu0 %v364
      %v408 = vpop.f32.mrf.mxu0
      %v409 = vadd.f32 0.0, %v408
      %410 = vmatmul.f32.gmra.mxu0 %v367
      %v411 = vpop.f32.mrf.mxu0
      %v412 = vadd.f32 0.0, %v411
      %413 = vdwg.mxu0
      %v415 = vsel %vm344, %v297, 0
      %v418 = vsel %vm344, %v298, 0
      %v421 = vsel %vm344, %v299, 0
      %v424 = vsel %vm344, %v300, 0
      %v427 = vsel %vm344, %v301, 0
      %v430 = vsel %vm344, %v302, 0
      %v433 = vsel %vm344, %v303, 0
      %v436 = vsel %vm344, %v304, 0
      %v439 = vsel %vm369, %v307, 0
      %441 = vmatpush.msra.mxu0 0.0
      %442 = vmatpush.msra.mxu0 0.0
      %443 = vmatpush.msra.mxu0 0.0
      %444 = vmatpush.msra.mxu0 0.0
      %445 = vmatpush.msra.mxu0 0.0
      %446 = vmatpush.msra.mxu0 0.0
      %447 = vmatpush.msra.mxu0 0.0
      %448 = vmatpush.msra.mxu0 0.0
      %449 = vmatpush.msra.mxu0 0.0
      %450 = vmatpush.msra.mxu0 0.0
      %451 = vmatpush.msra.mxu0 0.0
      %452 = vmatpush.msra.mxu0 0.0
      %453 = vmatpush.msra.mxu0 0.0
      %454 = vmatpush.msra.mxu0 0.0
      %455 = vmatpush.msra.mxu0 %v439
      %456 = vmatpush.msra.mxu0 %v306
      %457 = vmatmul.f32.gmra.mxu0 %v415
      %v458 = vpop.f32.mrf.mxu0
      %v459 = vadd.f32 %v391, %v458
      %460 = vmatmul.f32.gmra.mxu0 %v418
      %v461 = vpop.f32.mrf.mxu0
      %v462 = vadd.f32 %v394, %v461
      %463 = vmatmul.f32.gmra.mxu0 %v421
      %v464 = vpop.f32.mrf.mxu0
      %v465 = vadd.f32 %v397, %v464
      %466 = vmatmul.f32.gmra.mxu0 %v424
      %v467 = vpop.f32.mrf.mxu0
      %v468 = vadd.f32 %v400, %v467
      %469 = vmatmul.f32.gmra.mxu0 %v427
      %v470 = vpop.f32.mrf.mxu0
      %v471 = vadd.f32 %v403, %v470
      %472 = vmatmul.f32.gmra.mxu0 %v430
      %v473 = vpop.f32.mrf.mxu0
      %v474 = vadd.f32 %v406, %v473
      %475 = vmatmul.f32.gmra.mxu0 %v433
      %v476 = vpop.f32.mrf.mxu0
      %v477 = vadd.f32 %v409, %v476
      %478 = vmatmul.f32.gmra.mxu0 %v436
      %v479 = vpop.f32.mrf.mxu0
      %v480 = vadd.f32 %v412, %v479
      %481 = vdwg.mxu0
      %v483 = vperm.slane %v266, 0
      %v485 = vadd.f32 %v459, %v483
      %v486 = vadd.f32 %v462, %v483
      %v487 = vadd.f32 %v465, %v483
      %v488 = vadd.f32 %v468, %v483
      %v489 = vadd.f32 %v471, %v483
      %v490 = vadd.f32 %v474, %v483
      %v491 = vadd.f32 %v477, %v483
      %v492 = vadd.f32 %v480, %v483
      %vm493 = vcmask 64512
      %494 = vst.msk [vmem:[%s262] sm:$0xff] %vm493, %v485
      %495 = vst.msk [vmem:[%s262 + $0x8] sm:$0xff] %vm493, %v486
      %496 = vst.msk [vmem:[%s262 + $0x10] sm:$0xff] %vm493, %v487
      %497 = vst.msk [vmem:[%s262 + $0x18] sm:$0xff] %vm493, %v488
      %498 = vst.msk [vmem:[%s262 + $0x20] sm:$0xff] %vm493, %v489
      %499 = vst.msk [vmem:[%s262 + $0x28] sm:$0xff] %vm493, %v490
      %500 = vst.msk [vmem:[%s262 + $0x30] sm:$0xff] %vm493, %v491
      %501 = vst.msk [vmem:[%s262 + $0x38] sm:$0xff] %vm493, %v492
      %v502 = vld [vmem:[%s252] sm:$0xff]
      %v503 = vld [vmem:[%s252 + $0x8] sm:$0xff]
      %v504 = vld [vmem:[%s252 + $0x10] sm:$0xff]
      %v505 = vld [vmem:[%s252 + $0x18] sm:$0xff]
      %v506 = vld [vmem:[%s252 + $0x20] sm:$0xff]
      %v507 = vld [vmem:[%s252 + $0x28] sm:$0xff]
      %v508 = vld [vmem:[%s252 + $0x30] sm:$0xff]
      %v509 = vld [vmem:[%s252 + $0x38] sm:$0xff]
      %v510 = vmul.f32 %v502, %v276
      %v511 = vmul.f32 %v503, %v276
      %v512 = vmul.f32 %v504, %v276
      %v513 = vmul.f32 %v505, %v276
      %v514 = vmul.f32 %v506, %v276
      %v515 = vmul.f32 %v507, %v276
      %v516 = vmul.f32 %v508, %v276
      %v517 = vmul.f32 %v509, %v276
      %v518 = vadd.f32 %v510, %v287
      %v519 = vadd.f32 %v511, %v287
      %v520 = vadd.f32 %v512, %v287
      %v521 = vadd.f32 %v513, %v287
      %v522 = vadd.f32 %v514, %v287
      %v523 = vadd.f32 %v515, %v287
      %v524 = vadd.f32 %v516, %v287
      %v525 = vadd.f32 %v517, %v287
      %v526 = vmax.f32 %v518, 0.0
      %v527 = vmax.f32 %v519, 0.0
      %v528 = vmax.f32 %v520, 0.0
      %v529 = vmax.f32 %v521, 0.0
      %v530 = vmax.f32 %v522, 0.0
      %v531 = vmax.f32 %v523, 0.0
      %v532 = vmax.f32 %v524, 0.0
      %v533 = vmax.f32 %v525, 0.0
      %v534 = vld [vmem:[%s3] sm:$0xff]
      %v535 = vld [vmem:[%s3 + $0x8] sm:$0x3f]
      %v536 = vld [vmem:[%s308] sm:$0xff]
      %v537 = vld [vmem:[%s308 + $0x8] sm:$0xff]
      %v538 = vld [vmem:[%s308 + $0x10] sm:$0xff]
      %v539 = vld [vmem:[%s308 + $0x18] sm:$0xff]
      %v540 = vld [vmem:[%s308 + $0x20] sm:$0xff]
      %v541 = vld [vmem:[%s308 + $0x28] sm:$0xff]
      %v542 = vld [vmem:[%s308 + $0x30] sm:$0xff]
      %v543 = vld [vmem:[%s308 + $0x38] sm:$0xff]
      %v544 = vmul.f32 %v536, %v276
      %v545 = vmul.f32 %v537, %v276
      %v546 = vmul.f32 %v538, %v276
      %v547 = vmul.f32 %v539, %v276
      %v548 = vmul.f32 %v540, %v276
      %v549 = vmul.f32 %v541, %v276
      %v550 = vmul.f32 %v542, %v276
      %v551 = vmul.f32 %v543, %v276
      %v552 = vadd.f32 %v544, %v287
      %v553 = vadd.f32 %v545, %v287
      %v554 = vadd.f32 %v546, %v287
      %v555 = vadd.f32 %v547, %v287
      %v556 = vadd.f32 %v548, %v287
      %v557 = vadd.f32 %v549, %v287
      %v558 = vadd.f32 %v550, %v287
      %v559 = vadd.f32 %v551, %v287
      %v560 = vmax.f32 %v552, 0.0
      %v561 = vmax.f32 %v553, 0.0
      %v562 = vmax.f32 %v554, 0.0
      %v563 = vmax.f32 %v555, 0.0
      %v564 = vmax.f32 %v556, 0.0
      %v565 = vmax.f32 %v557, 0.0
      %v566 = vmax.f32 %v558, 0.0
      %v567 = vmax.f32 %v559, 0.0
      %v568 = vld [vmem:[%s305] sm:$0xff]
      %v569 = vld [vmem:[%s305 + $0x8] sm:$0x3f]
      %v571 = vsel %vm344, %v560, 0
      %v574 = vsel %vm344, %v561, 0
      %v577 = vsel %vm344, %v562, 0
      %v580 = vsel %vm344, %v563, 0
      %v583 = vsel %vm344, %v564, 0
      %v586 = vsel %vm344, %v565, 0
      %v589 = vsel %vm344, %v566, 0
      %v592 = vsel %vm344, %v567, 0
      %v595 = vsel %vm369, %v569, 0
      %597 = vmatpush.msra.mxu0 0.0
      %598 = vmatpush.msra.mxu0 0.0
      %599 = vmatpush.msra.mxu0 0.0
      %600 = vmatpush.msra.mxu0 0.0
      %601 = vmatpush.msra.mxu0 0.0
      %602 = vmatpush.msra.mxu0 0.0
      %603 = vmatpush.msra.mxu0 0.0
      %604 = vmatpush.msra.mxu0 0.0
      %605 = vmatpush.msra.mxu0 0.0
      %606 = vmatpush.msra.mxu0 0.0
      %607 = vmatpush.msra.mxu0 0.0
      %608 = vmatpush.msra.mxu0 0.0
      %609 = vmatpush.msra.mxu0 0.0
      %610 = vmatpush.msra.mxu0 0.0
      %611 = vmatpush.msra.mxu0 %v595
      %612 = vmatpush.msra.mxu0 %v568
      %613 = vmatmul.f32.gmra.mxu0 %v571
      %v614 = vpop.f32.mrf.mxu0
      %v615 = vadd.f32 0.0, %v614
      %616 = vmatmul.f32.gmra.mxu0 %v574
      %v617 = vpop.f32.mrf.mxu0
      %v618 = vadd.f32 0.0, %v617
      %619 = vmatmul.f32.gmra.mxu0 %v577
      %v620 = vpop.f32.mrf.mxu0
      %v621 = vadd.f32 0.0, %v620
      %622 = vmatmul.f32.gmra.mxu0 %v580
      %v623 = vpop.f32.mrf.mxu0
      %v624 = vadd.f32 0.0, %v623
      %625 = vmatmul.f32.gmra.mxu0 %v583
      %v626 = vpop.f32.mrf.mxu0
      %v627 = vadd.f32 0.0, %v626
      %628 = vmatmul.f32.gmra.mxu0 %v586
      %v629 = vpop.f32.mrf.mxu0
      %v630 = vadd.f32 0.0, %v629
      %631 = vmatmul.f32.gmra.mxu0 %v589
      %v632 = vpop.f32.mrf.mxu0
      %v633 = vadd.f32 0.0, %v632
      %634 = vmatmul.f32.gmra.mxu0 %v592
      %v635 = vpop.f32.mrf.mxu0
      %v636 = vadd.f32 0.0, %v635
      %637 = vdwg.mxu0
      %v639 = vsel %vm344, %v526, 0
      %v642 = vsel %vm344, %v527, 0
      %v645 = vsel %vm344, %v528, 0
      %v648 = vsel %vm344, %v529, 0
      %v651 = vsel %vm344, %v530, 0
      %v654 = vsel %vm344, %v531, 0
      %v657 = vsel %vm344, %v532, 0
      %v660 = vsel %vm344, %v533, 0
      %v663 = vsel %vm369, %v535, 0
      %665 = vmatpush.msra.mxu0 0.0
      %666 = vmatpush.msra.mxu0 0.0
      %667 = vmatpush.msra.mxu0 0.0
      %668 = vmatpush.msra.mxu0 0.0
      %669 = vmatpush.msra.mxu0 0.0
      %670 = vmatpush.msra.mxu0 0.0
      %671 = vmatpush.msra.mxu0 0.0
      %672 = vmatpush.msra.mxu0 0.0
      %673 = vmatpush.msra.mxu0 0.0
      %674 = vmatpush.msra.mxu0 0.0
      %675 = vmatpush.msra.mxu0 0.0
      %676 = vmatpush.msra.mxu0 0.0
      %677 = vmatpush.msra.mxu0 0.0
      %678 = vmatpush.msra.mxu0 0.0
      %679 = vmatpush.msra.mxu0 %v663
      %680 = vmatpush.msra.mxu0 %v534
      %681 = vmatmul.f32.gmra.mxu0 %v639
      %v682 = vpop.f32.mrf.mxu0
      %v683 = vadd.f32 %v615, %v682
      %684 = vmatmul.f32.gmra.mxu0 %v642
      %v685 = vpop.f32.mrf.mxu0
      %v686 = vadd.f32 %v618, %v685
      %687 = vmatmul.f32.gmra.mxu0 %v645
      %v688 = vpop.f32.mrf.mxu0
      %v689 = vadd.f32 %v621, %v688
      %690 = vmatmul.f32.gmra.mxu0 %v648
      %v691 = vpop.f32.mrf.mxu0
      %v692 = vadd.f32 %v624, %v691
      %693 = vmatmul.f32.gmra.mxu0 %v651
      %v694 = vpop.f32.mrf.mxu0
      %v695 = vadd.f32 %v627, %v694
      %696 = vmatmul.f32.gmra.mxu0 %v654
      %v697 = vpop.f32.mrf.mxu0
      %v698 = vadd.f32 %v630, %v697
      %699 = vmatmul.f32.gmra.mxu0 %v657
      %v700 = vpop.f32.mrf.mxu0
      %v701 = vadd.f32 %v633, %v700
      %702 = vmatmul.f32.gmra.mxu0 %v660
      %v703 = vpop.f32.mrf.mxu0
      %v704 = vadd.f32 %v636, %v703
      %705 = vdwg.mxu0
      %s706 = scalar_lea.vmem %s252, 128
      %v707 = vld [vmem:[%s706] sm:$0xff]
      %v708 = vld [vmem:[%s706 + $0x8] sm:$0xff]
      %v709 = vld [vmem:[%s706 + $0x10] sm:$0xff]
      %v710 = vld [vmem:[%s706 + $0x18] sm:$0xff]
      %v711 = vld [vmem:[%s706 + $0x20] sm:$0xff]
      %v712 = vld [vmem:[%s706 + $0x28] sm:$0xff]
      %v713 = vld [vmem:[%s706 + $0x30] sm:$0xff]
      %v714 = vld [vmem:[%s706 + $0x38] sm:$0xff]
      %v715 = vmul.f32 %v707, %v276
      %v716 = vmul.f32 %v708, %v276
      %v717 = vmul.f32 %v709, %v276
      %v718 = vmul.f32 %v710, %v276
      %v719 = vmul.f32 %v711, %v276
      %v720 = vmul.f32 %v712, %v276
      %v721 = vmul.f32 %v713, %v276
      %v722 = vmul.f32 %v714, %v276
      %v723 = vadd.f32 %v715, %v287
      %v724 = vadd.f32 %v716, %v287
      %v725 = vadd.f32 %v717, %v287
      %v726 = vadd.f32 %v718, %v287
      %v727 = vadd.f32 %v719, %v287
      %v728 = vadd.f32 %v720, %v287
      %v729 = vadd.f32 %v721, %v287
      %v730 = vadd.f32 %v722, %v287
      %v731 = vmax.f32 %v723, 0.0
      %v732 = vmax.f32 %v724, 0.0
      %v733 = vmax.f32 %v725, 0.0
      %v734 = vmax.f32 %v726, 0.0
      %v735 = vmax.f32 %v727, 0.0
      %v736 = vmax.f32 %v728, 0.0
      %v737 = vmax.f32 %v729, 0.0
      %v738 = vmax.f32 %v730, 0.0
      %v739 = vld [vmem:[%s341] sm:$0xff]
      %v740 = vld [vmem:[%s341 + $0x8] sm:$0x3f]
      %v742 = vsel %vm344, %v731, 0
      %v745 = vsel %vm344, %v732, 0
      %v748 = vsel %vm344, %v733, 0
      %v751 = vsel %vm344, %v734, 0
      %v754 = vsel %vm344, %v735, 0
      %v757 = vsel %vm344, %v736, 0
      %v760 = vsel %vm344, %v737, 0
      %v763 = vsel %vm344, %v738, 0
      %v766 = vsel %vm369, %v740, 0
      %768 = vmatpush.msra.mxu0 0.0
      %769 = vmatpush.msra.mxu0 0.0
      %770 = vmatpush.msra.mxu0 0.0
      %771 = vmatpush.msra.mxu0 0.0
      %772 = vmatpush.msra.mxu0 0.0
      %773 = vmatpush.msra.mxu0 0.0
      %774 = vmatpush.msra.mxu0 0.0
      %775 = vmatpush.msra.mxu0 0.0
      %776 = vmatpush.msra.mxu0 0.0
      %777 = vmatpush.msra.mxu0 0.0
      %778 = vmatpush.msra.mxu0 0.0
      %779 = vmatpush.msra.mxu0 0.0
      %780 = vmatpush.msra.mxu0 0.0
      %781 = vmatpush.msra.mxu0 0.0
      %782 = vmatpush.msra.mxu0 %v766
      %783 = vmatpush.msra.mxu0 %v739
      %784 = vmatmul.f32.gmra.mxu0 %v742
      %v785 = vpop.f32.mrf.mxu0
      %v786 = vadd.f32 0.0, %v785
      %787 = vmatmul.f32.gmra.mxu0 %v745
      %v788 = vpop.f32.mrf.mxu0
      %v789 = vadd.f32 0.0, %v788
      %790 = vmatmul.f32.gmra.mxu0 %v748
      %v791 = vpop.f32.mrf.mxu0
      %v792 = vadd.f32 0.0, %v791
      %793 = vmatmul.f32.gmra.mxu0 %v751
      %v794 = vpop.f32.mrf.mxu0
      %v795 = vadd.f32 0.0, %v794
      %796 = vmatmul.f32.gmra.mxu0 %v754
      %v797 = vpop.f32.mrf.mxu0
      %v798 = vadd.f32 0.0, %v797
      %799 = vmatmul.f32.gmra.mxu0 %v757
      %v800 = vpop.f32.mrf.mxu0
      %v801 = vadd.f32 0.0, %v800
      %802 = vmatmul.f32.gmra.mxu0 %v760
      %v803 = vpop.f32.mrf.mxu0
      %v804 = vadd.f32 0.0, %v803
      %805 = vmatmul.f32.gmra.mxu0 %v763
      %v806 = vpop.f32.mrf.mxu0
      %v807 = vadd.f32 0.0, %v806
      %808 = vdwg.mxu0
      %v809 = vadd.f32 %v683, %v786
      %v810 = vadd.f32 %v686, %v789
      %v811 = vadd.f32 %v689, %v792
      %v812 = vadd.f32 %v692, %v795
      %v813 = vadd.f32 %v695, %v798
      %v814 = vadd.f32 %v698, %v801
      %v815 = vadd.f32 %v701, %v804
      %v816 = vadd.f32 %v704, %v807
      %v817 = vadd.f32 %v809, %v483
      %v818 = vadd.f32 %v810, %v483
      %v819 = vadd.f32 %v811, %v483
      %v820 = vadd.f32 %v812, %v483
      %v821 = vadd.f32 %v813, %v483
      %v822 = vadd.f32 %v814, %v483
      %v823 = vadd.f32 %v815, %v483
      %v824 = vadd.f32 %v816, %v483
      %s825 = scalar_lea.vmem %s262, 64
      %826 = vst.msk [vmem:[%s825] sm:$0xff] %vm493, %v817
      %827 = vst.msk [vmem:[%s825 + $0x8] sm:$0xff] %vm493, %v818
      %828 = vst.msk [vmem:[%s825 + $0x10] sm:$0xff] %vm493, %v819
      %829 = vst.msk [vmem:[%s825 + $0x18] sm:$0xff] %vm493, %v820
      %830 = vst.msk [vmem:[%s825 + $0x20] sm:$0xff] %vm493, %v821
      %831 = vst.msk [vmem:[%s825 + $0x28] sm:$0xff] %vm493, %v822
      %832 = vst.msk [vmem:[%s825 + $0x30] sm:$0xff] %vm493, %v823
      %833 = vst.msk [vmem:[%s825 + $0x38] sm:$0xff] %vm493, %v824
      %v834 = vld [vmem:[%s308] sm:$0xff]
      %v835 = vld [vmem:[%s308 + $0x8] sm:$0xff]
      %v836 = vld [vmem:[%s308 + $0x10] sm:$0xff]
      %v837 = vld [vmem:[%s308 + $0x18] sm:$0xff]
      %v838 = vld [vmem:[%s308 + $0x20] sm:$0xff]
      %v839 = vld [vmem:[%s308 + $0x28] sm:$0xff]
      %v840 = vld [vmem:[%s308 + $0x30] sm:$0xff]
      %v841 = vld [vmem:[%s308 + $0x38] sm:$0xff]
      %v842 = vmul.f32 %v834, %v276
      %v843 = vmul.f32 %v835, %v276
      %v844 = vmul.f32 %v836, %v276
      %v845 = vmul.f32 %v837, %v276
      %v846 = vmul.f32 %v838, %v276
      %v847 = vmul.f32 %v839, %v276
      %v848 = vmul.f32 %v840, %v276
      %v849 = vmul.f32 %v841, %v276
      %v850 = vadd.f32 %v842, %v287
      %v851 = vadd.f32 %v843, %v287
      %v852 = vadd.f32 %v844, %v287
      %v853 = vadd.f32 %v845, %v287
      %v854 = vadd.f32 %v846, %v287
      %v855 = vadd.f32 %v847, %v287
      %v856 = vadd.f32 %v848, %v287
      %v857 = vadd.f32 %v849, %v287
      %v858 = vmax.f32 %v850, 0.0
      %v859 = vmax.f32 %v851, 0.0
      %v860 = vmax.f32 %v852, 0.0
      %v861 = vmax.f32 %v853, 0.0
      %v862 = vmax.f32 %v854, 0.0
      %v863 = vmax.f32 %v855, 0.0
      %v864 = vmax.f32 %v856, 0.0
      %v865 = vmax.f32 %v857, 0.0
      %v866 = vld [vmem:[%s3] sm:$0xff]
      %v867 = vld [vmem:[%s3 + $0x8] sm:$0x3f]
      %v868 = vld [vmem:[%s706] sm:$0xff]
      %v869 = vld [vmem:[%s706 + $0x8] sm:$0xff]
      %v870 = vld [vmem:[%s706 + $0x10] sm:$0xff]
      %v871 = vld [vmem:[%s706 + $0x18] sm:$0xff]
      %v872 = vld [vmem:[%s706 + $0x20] sm:$0xff]
      %v873 = vld [vmem:[%s706 + $0x28] sm:$0xff]
      %v874 = vld [vmem:[%s706 + $0x30] sm:$0xff]
      %v875 = vld [vmem:[%s706 + $0x38] sm:$0xff]
      %v876 = vmul.f32 %v868, %v276
      %v877 = vmul.f32 %v869, %v276
      %v878 = vmul.f32 %v870, %v276
      %v879 = vmul.f32 %v871, %v276
      %v880 = vmul.f32 %v872, %v276
      %v881 = vmul.f32 %v873, %v276
      %v882 = vmul.f32 %v874, %v276
      %v883 = vmul.f32 %v875, %v276
      %v884 = vadd.f32 %v876, %v287
      %v885 = vadd.f32 %v877, %v287
      %v886 = vadd.f32 %v878, %v287
      %v887 = vadd.f32 %v879, %v287
      %v888 = vadd.f32 %v880, %v287
      %v889 = vadd.f32 %v881, %v287
      %v890 = vadd.f32 %v882, %v287
      %v891 = vadd.f32 %v883, %v287
      %v892 = vmax.f32 %v884, 0.0
      %v893 = vmax.f32 %v885, 0.0
      %v894 = vmax.f32 %v886, 0.0
      %v895 = vmax.f32 %v887, 0.0
      %v896 = vmax.f32 %v888, 0.0
      %v897 = vmax.f32 %v889, 0.0
      %v898 = vmax.f32 %v890, 0.0
      %v899 = vmax.f32 %v891, 0.0
      %v900 = vld [vmem:[%s305] sm:$0xff]
      %v901 = vld [vmem:[%s305 + $0x8] sm:$0x3f]
      %v903 = vsel %vm344, %v892, 0
      %v906 = vsel %vm344, %v893, 0
      %v909 = vsel %vm344, %v894, 0
      %v912 = vsel %vm344, %v895, 0
      %v915 = vsel %vm344, %v896, 0
      %v918 = vsel %vm344, %v897, 0
      %v921 = vsel %vm344, %v898, 0
      %v924 = vsel %vm344, %v899, 0
      %v927 = vsel %vm369, %v901, 0
      %929 = vmatpush.msra.mxu0 0.0
      %930 = vmatpush.msra.mxu0 0.0
      %931 = vmatpush.msra.mxu0 0.0
      %932 = vmatpush.msra.mxu0 0.0
      %933 = vmatpush.msra.mxu0 0.0
      %934 = vmatpush.msra.mxu0 0.0
      %935 = vmatpush.msra.mxu0 0.0
      %936 = vmatpush.msra.mxu0 0.0
      %937 = vmatpush.msra.mxu0 0.0
      %938 = vmatpush.msra.mxu0 0.0
      %939 = vmatpush.msra.mxu0 0.0
      %940 = vmatpush.msra.mxu0 0.0
      %941 = vmatpush.msra.mxu0 0.0
      %942 = vmatpush.msra.mxu0 0.0
      %943 = vmatpush.msra.mxu0 %v927
      %944 = vmatpush.msra.mxu0 %v900
      %945 = vmatmul.f32.gmra.mxu0 %v903
      %v946 = vpop.f32.mrf.mxu0
      %v947 = vadd.f32 0.0, %v946
      %948 = vmatmul.f32.gmra.mxu0 %v906
      %v949 = vpop.f32.mrf.mxu0
      %v950 = vadd.f32 0.0, %v949
      %951 = vmatmul.f32.gmra.mxu0 %v909
      %v952 = vpop.f32.mrf.mxu0
      %v953 = vadd.f32 0.0, %v952
      %954 = vmatmul.f32.gmra.mxu0 %v912
      %v955 = vpop.f32.mrf.mxu0
      %v956 = vadd.f32 0.0, %v955
      %957 = vmatmul.f32.gmra.mxu0 %v915
      %v958 = vpop.f32.mrf.mxu0
      %v959 = vadd.f32 0.0, %v958
      %960 = vmatmul.f32.gmra.mxu0 %v918
      %v961 = vpop.f32.mrf.mxu0
      %v962 = vadd.f32 0.0, %v961
      %963 = vmatmul.f32.gmra.mxu0 %v921
      %v964 = vpop.f32.mrf.mxu0
      %v965 = vadd.f32 0.0, %v964
      %966 = vmatmul.f32.gmra.mxu0 %v924
      %v967 = vpop.f32.mrf.mxu0
      %v968 = vadd.f32 0.0, %v967
      %969 = vdwg.mxu0
      %v971 = vsel %vm344, %v858, 0
      %v974 = vsel %vm344, %v859, 0
      %v977 = vsel %vm344, %v860, 0
      %v980 = vsel %vm344, %v861, 0
      %v983 = vsel %vm344, %v862, 0
      %v986 = vsel %vm344, %v863, 0
      %v989 = vsel %vm344, %v864, 0
      %v992 = vsel %vm344, %v865, 0
      %v995 = vsel %vm369, %v867, 0
      %997 = vmatpush.msra.mxu0 0.0
      %998 = vmatpush.msra.mxu0 0.0
      %999 = vmatpush.msra.mxu0 0.0
      %1000 = vmatpush.msra.mxu0 0.0
      %1001 = vmatpush.msra.mxu0 0.0
      %1002 = vmatpush.msra.mxu0 0.0
      %1003 = vmatpush.msra.mxu0 0.0
      %1004 = vmatpush.msra.mxu0 0.0
      %1005 = vmatpush.msra.mxu0 0.0
      %1006 = vmatpush.msra.mxu0 0.0
      %1007 = vmatpush.msra.mxu0 0.0
      %1008 = vmatpush.msra.mxu0 0.0
      %1009 = vmatpush.msra.mxu0 0.0
      %1010 = vmatpush.msra.mxu0 0.0
      %1011 = vmatpush.msra.mxu0 %v995
      %1012 = vmatpush.msra.mxu0 %v866
      %1013 = vmatmul.f32.gmra.mxu0 %v971
      %v1014 = vpop.f32.mrf.mxu0
      %v1015 = vadd.f32 %v947, %v1014
      %1016 = vmatmul.f32.gmra.mxu0 %v974
      %v1017 = vpop.f32.mrf.mxu0
      %v1018 = vadd.f32 %v950, %v1017
      %1019 = vmatmul.f32.gmra.mxu0 %v977
      %v1020 = vpop.f32.mrf.mxu0
      %v1021 = vadd.f32 %v953, %v1020
      %1022 = vmatmul.f32.gmra.mxu0 %v980
      %v1023 = vpop.f32.mrf.mxu0
      %v1024 = vadd.f32 %v956, %v1023
      %1025 = vmatmul.f32.gmra.mxu0 %v983
      %v1026 = vpop.f32.mrf.mxu0
      %v1027 = vadd.f32 %v959, %v1026
      %1028 = vmatmul.f32.gmra.mxu0 %v986
      %v1029 = vpop.f32.mrf.mxu0
      %v1030 = vadd.f32 %v962, %v1029
      %1031 = vmatmul.f32.gmra.mxu0 %v989
      %v1032 = vpop.f32.mrf.mxu0
      %v1033 = vadd.f32 %v965, %v1032
      %1034 = vmatmul.f32.gmra.mxu0 %v992
      %v1035 = vpop.f32.mrf.mxu0
      %v1036 = vadd.f32 %v968, %v1035
      %1037 = vdwg.mxu0
      %s1038 = scalar_lea.vmem %s252, 192
      %v1039 = vld [vmem:[%s1038] sm:$0xff]
      %v1040 = vld [vmem:[%s1038 + $0x8] sm:$0xff]
      %v1041 = vld [vmem:[%s1038 + $0x10] sm:$0xff]
      %v1042 = vld [vmem:[%s1038 + $0x18] sm:$0xff]
      %v1043 = vld [vmem:[%s1038 + $0x20] sm:$0xff]
      %v1044 = vld [vmem:[%s1038 + $0x28] sm:$0xff]
      %v1045 = vld [vmem:[%s1038 + $0x30] sm:$0xff]
      %v1046 = vld [vmem:[%s1038 + $0x38] sm:$0xff]
      %v1047 = vmul.f32 %v1039, %v276
      %v1048 = vmul.f32 %v1040, %v276
      %v1049 = vmul.f32 %v1041, %v276
      %v1050 = vmul.f32 %v1042, %v276
      %v1051 = vmul.f32 %v1043, %v276
      %v1052 = vmul.f32 %v1044, %v276
      %v1053 = vmul.f32 %v1045, %v276
      %v1054 = vmul.f32 %v1046, %v276
      %v1055 = vadd.f32 %v1047, %v287
      %v1056 = vadd.f32 %v1048, %v287
      %v1057 = vadd.f32 %v1049, %v287
      %v1058 = vadd.f32 %v1050, %v287
      %v1059 = vadd.f32 %v1051, %v287
      %v1060 = vadd.f32 %v1052, %v287
      %v1061 = vadd.f32 %v1053, %v287
      %v1062 = vadd.f32 %v1054, %v287
      %v1063 = vmax.f32 %v1055, 0.0
      %v1064 = vmax.f32 %v1056, 0.0
      %v1065 = vmax.f32 %v1057, 0.0
      %v1066 = vmax.f32 %v1058, 0.0
      %v1067 = vmax.f32 %v1059, 0.0
      %v1068 = vmax.f32 %v1060, 0.0
      %v1069 = vmax.f32 %v1061, 0.0
      %v1070 = vmax.f32 %v1062, 0.0
      %v1071 = vld [vmem:[%s341] sm:$0xff]
      %v1072 = vld [vmem:[%s341 + $0x8] sm:$0x3f]
      %v1074 = vsel %vm344, %v1063, 0
      %v1077 = vsel %vm344, %v1064, 0
      %v1080 = vsel %vm344, %v1065, 0
      %v1083 = vsel %vm344, %v1066, 0
      %v1086 = vsel %vm344, %v1067, 0
      %v1089 = vsel %vm344, %v1068, 0
      %v1092 = vsel %vm344, %v1069, 0
      %v1095 = vsel %vm344, %v1070, 0
      %v1098 = vsel %vm369, %v1072, 0
      %1100 = vmatpush.msra.mxu0 0.0
      %1101 = vmatpush.msra.mxu0 0.0
      %1102 = vmatpush.msra.mxu0 0.0
      %1103 = vmatpush.msra.mxu0 0.0
      %1104 = vmatpush.msra.mxu0 0.0
      %1105 = vmatpush.msra.mxu0 0.0
      %1106 = vmatpush.msra.mxu0 0.0
      %1107 = vmatpush.msra.mxu0 0.0
      %1108 = vmatpush.msra.mxu0 0.0
      %1109 = vmatpush.msra.mxu0 0.0
      %1110 = vmatpush.msra.mxu0 0.0
      %1111 = vmatpush.msra.mxu0 0.0
      %1112 = vmatpush.msra.mxu0 0.0
      %1113 = vmatpush.msra.mxu0 0.0
      %1114 = vmatpush.msra.mxu0 %v1098
      %1115 = vmatpush.msra.mxu0 %v1071
      %1116 = vmatmul.f32.gmra.mxu0 %v1074
      %v1117 = vpop.f32.mrf.mxu0
      %v1118 = vadd.f32 0.0, %v1117
      %1119 = vmatmul.f32.gmra.mxu0 %v1077
      %v1120 = vpop.f32.mrf.mxu0
      %v1121 = vadd.f32 0.0, %v1120
      %1122 = vmatmul.f32.gmra.mxu0 %v1080
      %v1123 = vpop.f32.mrf.mxu0
      %v1124 = vadd.f32 0.0, %v1123
      %1125 = vmatmul.f32.gmra.mxu0 %v1083
      %v1126 = vpop.f32.mrf.mxu0
      %v1127 = vadd.f32 0.0, %v1126
      %1128 = vmatmul.f32.gmra.mxu0 %v1086
      %v1129 = vpop.f32.mrf.mxu0
      %v1130 = vadd.f32 0.0, %v1129
      %1131 = vmatmul.f32.gmra.mxu0 %v1089
      %v1132 = vpop.f32.mrf.mxu0
      %v1133 = vadd.f32 0.0, %v1132
      %1134 = vmatmul.f32.gmra.mxu0 %v1092
      %v1135 = vpop.f32.mrf.mxu0
      %v1136 = vadd.f32 0.0, %v1135
      %1137 = vmatmul.f32.gmra.mxu0 %v1095
      %v1138 = vpop.f32.mrf.mxu0
      %v1139 = vadd.f32 0.0, %v1138
      %1140 = vdwg.mxu0
      %v1141 = vadd.f32 %v1015, %v1118
      %v1142 = vadd.f32 %v1018, %v1121
      %v1143 = vadd.f32 %v1021, %v1124
      %v1144 = vadd.f32 %v1024, %v1127
      %v1145 = vadd.f32 %v1027, %v1130
      %v1146 = vadd.f32 %v1030, %v1133
      %v1147 = vadd.f32 %v1033, %v1136
      %v1148 = vadd.f32 %v1036, %v1139
      %v1149 = vadd.f32 %v1141, %v483
      %v1150 = vadd.f32 %v1142, %v483
      %v1151 = vadd.f32 %v1143, %v483
      %v1152 = vadd.f32 %v1144, %v483
      %v1153 = vadd.f32 %v1145, %v483
      %v1154 = vadd.f32 %v1146, %v483
      %v1155 = vadd.f32 %v1147, %v483
      %v1156 = vadd.f32 %v1148, %v483
      %s1157 = scalar_lea.vmem %s262, 128
      %1158 = vst.msk [vmem:[%s1157] sm:$0xff] %vm493, %v1149
      %1159 = vst.msk [vmem:[%s1157 + $0x8] sm:$0xff] %vm493, %v1150
      %1160 = vst.msk [vmem:[%s1157 + $0x10] sm:$0xff] %vm493, %v1151
      %1161 = vst.msk [vmem:[%s1157 + $0x18] sm:$0xff] %vm493, %v1152
      %1162 = vst.msk [vmem:[%s1157 + $0x20] sm:$0xff] %vm493, %v1153
      %1163 = vst.msk [vmem:[%s1157 + $0x28] sm:$0xff] %vm493, %v1154
      %1164 = vst.msk [vmem:[%s1157 + $0x30] sm:$0xff] %vm493, %v1155
      %1165 = vst.msk [vmem:[%s1157 + $0x38] sm:$0xff] %vm493, %v1156
      %v1166 = vld [vmem:[%s706] sm:$0xff]
      %v1167 = vld [vmem:[%s706 + $0x8] sm:$0xff]
      %v1168 = vld [vmem:[%s706 + $0x10] sm:$0xff]
      %v1169 = vld [vmem:[%s706 + $0x18] sm:$0xff]
      %v1170 = vld [vmem:[%s706 + $0x20] sm:$0xff]
      %v1171 = vld [vmem:[%s706 + $0x28] sm:$0xff]
      %v1172 = vld [vmem:[%s706 + $0x30] sm:$0xff]
      %v1173 = vld [vmem:[%s706 + $0x38] sm:$0xff]
      %v1174 = vmul.f32 %v1166, %v276
      %v1175 = vmul.f32 %v1167, %v276
      %v1176 = vmul.f32 %v1168, %v276
      %v1177 = vmul.f32 %v1169, %v276
      %v1178 = vmul.f32 %v1170, %v276
      %v1179 = vmul.f32 %v1171, %v276
      %v1180 = vmul.f32 %v1172, %v276
      %v1181 = vmul.f32 %v1173, %v276
      %v1182 = vadd.f32 %v1174, %v287
      %v1183 = vadd.f32 %v1175, %v287
      %v1184 = vadd.f32 %v1176, %v287
      %v1185 = vadd.f32 %v1177, %v287
      %v1186 = vadd.f32 %v1178, %v287
      %v1187 = vadd.f32 %v1179, %v287
      %v1188 = vadd.f32 %v1180, %v287
      %v1189 = vadd.f32 %v1181, %v287
      %v1190 = vmax.f32 %v1182, 0.0
      %v1191 = vmax.f32 %v1183, 0.0
      %v1192 = vmax.f32 %v1184, 0.0
      %v1193 = vmax.f32 %v1185, 0.0
      %v1194 = vmax.f32 %v1186, 0.0
      %v1195 = vmax.f32 %v1187, 0.0
      %v1196 = vmax.f32 %v1188, 0.0
      %v1197 = vmax.f32 %v1189, 0.0
      %v1198 = vld [vmem:[%s3] sm:$0xff]
      %v1199 = vld [vmem:[%s3 + $0x8] sm:$0x3f]
      %v1200 = vld [vmem:[%s1038] sm:$0xff]
      %v1201 = vld [vmem:[%s1038 + $0x8] sm:$0xff]
      %v1202 = vld [vmem:[%s1038 + $0x10] sm:$0xff]
      %v1203 = vld [vmem:[%s1038 + $0x18] sm:$0xff]
      %v1204 = vld [vmem:[%s1038 + $0x20] sm:$0xff]
      %v1205 = vld [vmem:[%s1038 + $0x28] sm:$0xff]
      %v1206 = vld [vmem:[%s1038 + $0x30] sm:$0xff]
      %v1207 = vld [vmem:[%s1038 + $0x38] sm:$0xff]
      %v1208 = vmul.f32 %v1200, %v276
      %v1209 = vmul.f32 %v1201, %v276
      %v1210 = vmul.f32 %v1202, %v276
      %v1211 = vmul.f32 %v1203, %v276
      %v1212 = vmul.f32 %v1204, %v276
      %v1213 = vmul.f32 %v1205, %v276
      %v1214 = vmul.f32 %v1206, %v276
      %v1215 = vmul.f32 %v1207, %v276
      %v1216 = vadd.f32 %v1208, %v287
      %v1217 = vadd.f32 %v1209, %v287
      %v1218 = vadd.f32 %v1210, %v287
      %v1219 = vadd.f32 %v1211, %v287
      %v1220 = vadd.f32 %v1212, %v287
      %v1221 = vadd.f32 %v1213, %v287
      %v1222 = vadd.f32 %v1214, %v287
      %v1223 = vadd.f32 %v1215, %v287
      %v1224 = vmax.f32 %v1216, 0.0
      %v1225 = vmax.f32 %v1217, 0.0
      %v1226 = vmax.f32 %v1218, 0.0
      %v1227 = vmax.f32 %v1219, 0.0
      %v1228 = vmax.f32 %v1220, 0.0
      %v1229 = vmax.f32 %v1221, 0.0
      %v1230 = vmax.f32 %v1222, 0.0
      %v1231 = vmax.f32 %v1223, 0.0
      %v1232 = vld [vmem:[%s305] sm:$0xff]
      %v1233 = vld [vmem:[%s305 + $0x8] sm:$0x3f]
      %v1235 = vsel %vm344, %v1224, 0
      %v1238 = vsel %vm344, %v1225, 0
      %v1241 = vsel %vm344, %v1226, 0
      %v1244 = vsel %vm344, %v1227, 0
      %v1247 = vsel %vm344, %v1228, 0
      %v1250 = vsel %vm344, %v1229, 0
      %v1253 = vsel %vm344, %v1230, 0
      %v1256 = vsel %vm344, %v1231, 0
      %v1259 = vsel %vm369, %v1233, 0
      %1261 = vmatpush.msra.mxu0 0.0
      %1262 = vmatpush.msra.mxu0 0.0
      %1263 = vmatpush.msra.mxu0 0.0
      %1264 = vmatpush.msra.mxu0 0.0
      %1265 = vmatpush.msra.mxu0 0.0
      %1266 = vmatpush.msra.mxu0 0.0
      %1267 = vmatpush.msra.mxu0 0.0
      %1268 = vmatpush.msra.mxu0 0.0
      %1269 = vmatpush.msra.mxu0 0.0
      %1270 = vmatpush.msra.mxu0 0.0
      %1271 = vmatpush.msra.mxu0 0.0
      %1272 = vmatpush.msra.mxu0 0.0
      %1273 = vmatpush.msra.mxu0 0.0
      %1274 = vmatpush.msra.mxu0 0.0
      %1275 = vmatpush.msra.mxu0 %v1259
      %1276 = vmatpush.msra.mxu0 %v1232
      %1277 = vmatmul.f32.gmra.mxu0 %v1235
      %v1278 = vpop.f32.mrf.mxu0
      %v1279 = vadd.f32 0.0, %v1278
      %1280 = vmatmul.f32.gmra.mxu0 %v1238
      %v1281 = vpop.f32.mrf.mxu0
      %v1282 = vadd.f32 0.0, %v1281
      %1283 = vmatmul.f32.gmra.mxu0 %v1241
      %v1284 = vpop.f32.mrf.mxu0
      %v1285 = vadd.f32 0.0, %v1284
      %1286 = vmatmul.f32.gmra.mxu0 %v1244
      %v1287 = vpop.f32.mrf.mxu0
      %v1288 = vadd.f32 0.0, %v1287
      %1289 = vmatmul.f32.gmra.mxu0 %v1247
      %v1290 = vpop.f32.mrf.mxu0
      %v1291 = vadd.f32 0.0, %v1290
      %1292 = vmatmul.f32.gmra.mxu0 %v1250
      %v1293 = vpop.f32.mrf.mxu0
      %v1294 = vadd.f32 0.0, %v1293
      %1295 = vmatmul.f32.gmra.mxu0 %v1253
      %v1296 = vpop.f32.mrf.mxu0
      %v1297 = vadd.f32 0.0, %v1296
      %1298 = vmatmul.f32.gmra.mxu0 %v1256
      %v1299 = vpop.f32.mrf.mxu0
      %v1300 = vadd.f32 0.0, %v1299
      %1301 = vdwg.mxu0
      %v1303 = vsel %vm344, %v1190, 0
      %v1306 = vsel %vm344, %v1191, 0
      %v1309 = vsel %vm344, %v1192, 0
      %v1312 = vsel %vm344, %v1193, 0
      %v1315 = vsel %vm344, %v1194, 0
      %v1318 = vsel %vm344, %v1195, 0
      %v1321 = vsel %vm344, %v1196, 0
      %v1324 = vsel %vm344, %v1197, 0
      %v1327 = vsel %vm369, %v1199, 0
      %1329 = vmatpush.msra.mxu0 0.0
      %1330 = vmatpush.msra.mxu0 0.0
      %1331 = vmatpush.msra.mxu0 0.0
      %1332 = vmatpush.msra.mxu0 0.0
      %1333 = vmatpush.msra.mxu0 0.0
      %1334 = vmatpush.msra.mxu0 0.0
      %1335 = vmatpush.msra.mxu0 0.0
      %1336 = vmatpush.msra.mxu0 0.0
      %1337 = vmatpush.msra.mxu0 0.0
      %1338 = vmatpush.msra.mxu0 0.0
      %1339 = vmatpush.msra.mxu0 0.0
      %1340 = vmatpush.msra.mxu0 0.0
      %1341 = vmatpush.msra.mxu0 0.0
      %1342 = vmatpush.msra.mxu0 0.0
      %1343 = vmatpush.msra.mxu0 %v1327
      %1344 = vmatpush.msra.mxu0 %v1198
      %1345 = vmatmul.f32.gmra.mxu0 %v1303
      %v1346 = vpop.f32.mrf.mxu0
      %v1347 = vadd.f32 %v1279, %v1346
      %1348 = vmatmul.f32.gmra.mxu0 %v1306
      %v1349 = vpop.f32.mrf.mxu0
      %v1350 = vadd.f32 %v1282, %v1349
      %1351 = vmatmul.f32.gmra.mxu0 %v1309
      %v1352 = vpop.f32.mrf.mxu0
      %v1353 = vadd.f32 %v1285, %v1352
      %1354 = vmatmul.f32.gmra.mxu0 %v1312
      %v1355 = vpop.f32.mrf.mxu0
      %v1356 = vadd.f32 %v1288, %v1355
      %1357 = vmatmul.f32.gmra.mxu0 %v1315
      %v1358 = vpop.f32.mrf.mxu0
      %v1359 = vadd.f32 %v1291, %v1358
      %1360 = vmatmul.f32.gmra.mxu0 %v1318
      %v1361 = vpop.f32.mrf.mxu0
      %v1362 = vadd.f32 %v1294, %v1361
      %1363 = vmatmul.f32.gmra.mxu0 %v1321
      %v1364 = vpop.f32.mrf.mxu0
      %v1365 = vadd.f32 %v1297, %v1364
      %1366 = vmatmul.f32.gmra.mxu0 %v1324
      %v1367 = vpop.f32.mrf.mxu0
      %v1368 = vadd.f32 %v1300, %v1367
      %1369 = vdwg.mxu0
      %v1370 = vadd.f32 %v1347, %v483
      %v1371 = vadd.f32 %v1350, %v483
      %v1372 = vadd.f32 %v1353, %v483
      %v1373 = vadd.f32 %v1356, %v483
      %v1374 = vadd.f32 %v1359, %v483
      %v1375 = vadd.f32 %v1362, %v483
      %v1376 = vadd.f32 %v1365, %v483
      %v1377 = vadd.f32 %v1368, %v483
      %s1378 = scalar_lea.vmem %s262, 192
      %1379 = vst.msk [vmem:[%s1378] sm:$0xff] %vm493, %v1370
      %1380 = vst.msk [vmem:[%s1378 + $0x8] sm:$0xff] %vm493, %v1371
      %1381 = vst.msk [vmem:[%s1378 + $0x10] sm:$0xff] %vm493, %v1372
      %1382 = vst.msk [vmem:[%s1378 + $0x18] sm:$0xff] %vm493, %v1373
      %1383 = vst.msk [vmem:[%s1378 + $0x20] sm:$0xff] %vm493, %v1374
      %1384 = vst.msk [vmem:[%s1378 + $0x28] sm:$0xff] %vm493, %v1375
      %1385 = vst.msk [vmem:[%s1378 + $0x30] sm:$0xff] %vm493, %v1376
      %1386 = vst.msk [vmem:[%s1378 + $0x38] sm:$0xff] %vm493, %v1377
      %s1387 = smul.u32 8, %s21
      %p1388 = scmp.lt.s32.totalorder %s20, 1
      %s1389 = scalar_select %p1388, %s20, 1
      %p1390 = scmp.lt.s32.totalorder %s1387, 7
      %s1391 = scalar_select %p1390, %s1387, 7
      %s1392 = smul.addr %s1389, 32
      %s1393 = sadd.s32 %s1391, %s1392
      %s1394 = smul.addr %s1393, 8
      %s1395 = scalar_lea.vmem %s5, %s1394
      // Predicated region
      $region41: #{r2plus1d_block.3} parent=39 // pred_check
        %p1396 = pneg %p160
      $region42: #{r2plus1d_block.3} parent=39 // pred_check_branch
        %1398 = sbr.rel (%p1396) target = $region44
      $region43: #{r2plus1d_block.3} parent=39 // pred_region
        %s1399 = smul.u32 8, %s21
      $region44: #{r2plus1d_block.3} parent=39 // pred_fallthru
        _
    $region40: #{r2plus1d_block.3} parent=5 // pred_fallthru
      _
    %p1400 = scmp.le.s32.totalorder 2, %s11
    // Predicated region
    $region45: #{r2plus1d_block.3} parent=5 // pred_check
      %p1401 = pneg %p1400
    $region46: #{r2plus1d_block.3} parent=5 // pred_check_branch
      %1403 = sbr.rel (%p1401) target = $region48
    $region47: #{r2plus1d_block.3} parent=5 // pred_region
      %s1404 = ssub.s32 %s11, 2
      // Predicated region
      $region49: #{r2plus1d_block.3} parent=47 // pred_check
        %p1405 = pneg %p166
      $region50: #{r2plus1d_block.3} parent=47 // pred_check_branch
        %1407 = sbr.rel (%p1405) target = $region52
      $region51: #{r2plus1d_block.3} parent=47 // pred_region
        %s1408 = smul.u32 8, %s23
        %p1409 = scmp.lt.s32.totalorder %s22, 1
        %s1410 = scalar_select %p1409, %s22, 1
        %p1411 = scmp.lt.s32.totalorder %s1408, 7
        %s1412 = scalar_select %p1411, %s1408, 7
        %s1413 = smul.addr %s1410, 32
        %s1414 = sadd.s32 %s1412, %s1413
        %s1415 = smul.addr %s1414, 8
        %s1416 = scalar_lea.vmem %s5, %s1415
      $region52: #{r2plus1d_block.3} parent=47 // pred_fallthru
        _
    $region48: #{r2plus1d_block.3} parent=5 // pred_fallthru
      _
  $region6: #{r2plus1d_block.3} parent=0 // loop_footer
    %s15 = sadd.s32 1, %s11
  $region7: #{r2plus1d_block.3} parent=0 // loop_footer_branch
    %10 = sbr.rel target = $region3
  $region8: #{r2plus1d_block.3} parent=0 // loop_exit
    _

</llo_original>
